<compile_context>
chip_gen: v7x
topology: tpu7x:2x2x1
jax: 0.10.0
libtpu: 0.0.40
codegen_flags: <defaults>
</compile_context>

<pallas_src>
import functools

import jax
import jax.numpy as jnp
from jax import lax
from jax.experimental import pallas as pl
from jax.experimental.pallas import tpu as pltpu


# ---------------------------------------------------------------------------
# Fused Pallas kernel: MLP + K APPNP propagation steps
# ---------------------------------------------------------------------------
def _appnp_fused_kernel(*refs, n_layers, k, alpha, n_chunks):
    # refs = (x, a_hbm, norm, w0, b0, ..., w_{L-1}, b_{L-1},
    #         out, a_vmem, h_scratch, dma_sem)
    x_ref, a_hbm, norm_ref = refs[0], refs[1], refs[2]
    wb = refs[3:3 + 2 * n_layers]
    o_ref = refs[3 + 2 * n_layers]
    a_vmem = refs[4 + 2 * n_layers]
    h_scratch = refs[5 + 2 * n_layers]
    dma_sem = refs[6 + 2 * n_layers]

    n = a_vmem.shape[0]
    rows = n // n_chunks

    # ---- start chunked A DMAs (tile-aligned row blocks); consumed below ----
    copies = []
    if k >= 1:
        for c in range(n_chunks):
            cp = pltpu.make_async_copy(
                a_hbm.at[pl.ds(c * rows, rows), :],
                a_vmem.at[pl.ds(c * rows, rows), :],
                dma_sem.at[c])
            cp.start()
            copies.append(cp)

    # ---- fused MLP: bf16 matmul operands, f32 accumulation, f32 biases -----
    h = x_ref[...]                                   # bf16 (N, F_in)
    for li in range(n_layers):
        w = wb[2 * li][...]                          # bf16 (in, out), pre-transposed
        b = wb[2 * li + 1][...]                      # f32  (1, out)
        acc = jnp.dot(h, w, preferred_element_type=jnp.float32) + b
        if li < n_layers - 1:
            h = jnp.maximum(acc, 0.0).astype(jnp.bfloat16)
        else:
            h = acc                                  # final layer stays f32

    # ---- propagation constants (hoisted out of the K loop) -----------------
    norm = norm_ref[...]                             # (N, 1) f32 (from wrapper)
    norm_b = jnp.broadcast_to(norm, h.shape)         # pre-matmul scale
    alpha_h0 = alpha * h                             # hoisted blend terms
    norm_out = (1.0 - alpha) * norm_b

    # ---- K steps of  h <- (1-alpha) * D^-1/2 A D^-1/2 h + alpha * h0 -------
    # P is never materialized: norm ⊙ (A @ (norm ⊙ h)).
    if k >= 1:
        # Step 1: consume A row blocks as they arrive (overlaps the DMA tail).
        hs0 = (norm_b * h).astype(jnp.bfloat16)
        for c in range(n_chunks):
            copies[c].wait()
            lo, hi = c * rows, (c + 1) * rows
            ph_c = jnp.dot(a_vmem[pl.ds(lo, rows), :], hs0,
                           preferred_element_type=jnp.float32)
            h_scratch[pl.ds(lo, rows), :] = (norm_out[lo:hi] * ph_c
                                             + alpha_h0[lo:hi])
        h = h_scratch[...]

        # Steps 2..K on the now fully resident adjacency.
        a = a_vmem[...]

        def body(_, hc):
            hs = (norm_b * hc).astype(jnp.bfloat16)              # bf16 operand
            ph = jnp.dot(a, hs, preferred_element_type=jnp.float32)
            return norm_out * ph + alpha_h0                      # f32 blend

        h = lax.fori_loop(1, k, body, h, unroll=(k <= 16))

    o_ref[...] = h.astype(o_ref.dtype)


# ---------------------------------------------------------------------------
# Wrapper
# ---------------------------------------------------------------------------
def egl_appnp_forward(params, adj, features, *, k, alpha):
    # TODO(synk): feat_drop / edge_drop are dropout layers; identity in eval mode.
    n = adj.shape[0]
    n_layers = len(params)
    n_classes = params[-1][0].shape[0]
    f_pad = ((n_classes + 127) // 128) * 128          # lane-dense output width

    # Pre-transpose weights to (in, out) and cast to bf16; biases stay f32.
    # Classifier out-dim zero-padded to f_pad lanes (zero columns stay exactly
    # zero through the propagation; sliced off below).
    wts = [w.T.astype(jnp.bfloat16) for w, _ in params]
    bss = [b.reshape(1, -1).astype(jnp.float32) for _, b in params]
    wts[-1] = jnp.pad(wts[-1], ((0, 0), (0, f_pad - n_classes)))
    bss[-1] = jnp.pad(bss[-1], ((0, 0), (0, f_pad - n_classes)))

    feats_bf16 = features.astype(jnp.bfloat16)
    adj_bf16 = adj.astype(jnp.bfloat16)               # exact for a 0/1 adjacency

    # Symmetric degree norm computed in the wrapper (fuses with the cast above).
    in_deg = jnp.sum(adj, axis=1, keepdims=True)
    norm = lax.rsqrt(jnp.maximum(in_deg, 1.0)).astype(jnp.float32)   # (N, 1)

    # Row-chunking of the A DMA: largest chunk count whose row block is a
    # multiple of 16 rows (bf16 sublane tile) so every DMA lands tile-aligned.
    n_chunks = 1
    for c in (8, 4, 2):
        if n % c == 0 and (n // c) % 16 == 0:
            n_chunks = c
            break

    flat_wb = []
    in_specs = [
        pl.BlockSpec(feats_bf16.shape, lambda: (0, 0)),
        pl.BlockSpec(memory_space=pl.ANY),            # adjacency in HBM; manual DMA
        pl.BlockSpec(norm.shape, lambda: (0, 0)),
    ]
    for w2, b2 in zip(wts, bss):
        flat_wb += [w2, b2]
        in_specs += [
            pl.BlockSpec(w2.shape, lambda: (0, 0)),
            pl.BlockSpec(b2.shape, lambda: (0, 0)),
        ]

    # Generation-aware VMEM cap (v7x: 64 MiB/TC; v5e/v6e: 128 MiB), with headroom.
    try:
        vmem_cap = int(pltpu.get_tpu_info().vmem_capacity_bytes)
    except Exception:
        vmem_cap = 64 << 20                           # conservative fallback
    vmem_cap = max(vmem_cap - (8 << 20), 16 << 20)

    wb_bytes = sum(int(t.size) * t.dtype.itemsize for t in flat_wb)
    est = (n * n * 2                                  # resident bf16 A scratch
           + n * f_pad * 4                            # first-step row-block scratch
           + 2 * (int(feats_bf16.size) * 2 + int(norm.size) * 4 + wb_bytes
                  + n * f_pad * 4)                    # pipelined in/out buffers
           + 8 * n * f_pad * 4                        # f32 loop temporaries
           + (2 << 20))
    vmem_limit = int(min(vmem_cap, max(2 * est, 32 << 20)))
    # TODO(synk): when est exceeds vmem_cap, dispatch to a streamed-A path (grid
    # over A row blocks, re-read each K step) and split rows across the two v7x
    # TensorCores; not implemented here.

    out = pl.pallas_call(
        functools.partial(_appnp_fused_kernel, n_layers=n_layers, k=int(k),
                          alpha=float(alpha), n_chunks=n_chunks),
        out_shape=jax.ShapeDtypeStruct((n, f_pad), jnp.float32),
        in_specs=in_specs,
        out_specs=pl.BlockSpec((n, f_pad), lambda: (0, 0)),
        scratch_shapes=[
            pltpu.VMEM((n, n), jnp.bfloat16),         # single-buffered adjacency
            pltpu.VMEM((n, f_pad), jnp.float32),      # first-step blended rows
            pltpu.SemaphoreType.DMA((n_chunks,)),
        ],
        compiler_params=pltpu.CompilerParams(vmem_limit_bytes=vmem_limit),
    )(feats_bf16, adj_bf16, norm, *flat_wb)

    return out[:, :n_classes]


# ---------------------------------------------------------------------------
# Parameter init (PyTorch nn.Linear convention: W is (out_features, in_features))
# ---------------------------------------------------------------------------
def init_params(key, in_feats, hiddens, n_classes, dtype=jnp.float32):
    dims = [in_feats] + list(hiddens) + [n_classes]
    params = []
    for i in range(len(dims) - 1):
        key, kw, kb = jax.random.split(key, 3)
        fan_in, fan_out = dims[i], dims[i + 1]
        bound = 1.0 / jnp.sqrt(jnp.asarray(fan_in, dtype))
        w = jax.random.uniform(kw, (fan_out, fan_in), dtype, -bound, bound)
        b = jax.random.uniform(kb, (fan_out,), dtype, -bound, bound)
        params.append((w, b))
    return params


# ---------------------------------------------------------------------------
# Pure-JAX f32 reference (matches the original PyTorch module semantics)
# ---------------------------------------------------------------------------
def egl_appnp_reference(params, adj, features, *, k, alpha):
    h = features
    h = jnp.maximum(h @ params[0][0].T + params[0][1], 0.0)
    for w, b in params[1:-1]:
        h = jnp.maximum(h @ w.T + b, 0.0)
    h = h @ params[-1][0].T + params[-1][1]
    in_deg = jnp.sum(adj, axis=1)
    norm = jnp.power(jnp.clip(in_deg, 1.0), -0.5)
    p = norm[:, None] * adj * norm[None, :]
    h0 = h
    for _ in range(k):
        h = (1.0 - alpha) * (p @ h) + alpha * h0
    return h


if __name__ == "__main__":
    key = jax.random.PRNGKey(0)

    # Small deterministic problem
    N = 64           # number of graph nodes
    in_feats = 16
    hiddens = [32, 16]
    n_classes = 8
    alpha = 0.1
    K = 10

    k_feat, k_adj, k_par = jax.random.split(key, 3)
    features = jax.random.normal(k_feat, (N, in_feats), jnp.float32)

    # Random sparse-ish directed graph with self-loops, dense adjacency A[dst, src].
    adj = (jax.random.uniform(k_adj, (N, N)) < 0.1).astype(jnp.float32)
    adj = jnp.maximum(adj, jnp.eye(N, dtype=jnp.float32))

    params = init_params(k_par, in_feats, hiddens, n_classes)

    out = egl_appnp_forward(params, adj, features, k=K, alpha=alpha)
    out = jax.block_until_ready(out)

    ref = egl_appnp_reference(params, adj, features, k=K, alpha=alpha)
    assert out.shape == (N, n_classes)
    # Tolerance relaxed vs pure-f32 reference: the MLP and propagation matmuls use
    # bf16 operands (exact 0/1 adjacency, bf16-rounded h/weights) with f32
    # accumulation and f32 blending.
    assert jnp.allclose(out, ref, rtol=4e-2, atol=4e-2), "mismatch vs reference"

    print("KERNEL_OK")
</pallas_src>

<mosaic_0001>
module attributes {stable_mosaic.version = 11 : i64} {
  func.func @_appnp_fused_kernel(%arg0: memref<64x16xbf16, #tpu.memory_space<vmem>>, %arg1: memref<64x64xbf16, #tpu.memory_space<any>>, %arg2: memref<64x1xf32, #tpu.memory_space<vmem>>, %arg3: memref<16x32xbf16, #tpu.memory_space<vmem>>, %arg4: memref<1x32xf32, #tpu.memory_space<vmem>>, %arg5: memref<32x16xbf16, #tpu.memory_space<vmem>>, %arg6: memref<1x16xf32, #tpu.memory_space<vmem>>, %arg7: memref<16x128xbf16, #tpu.memory_space<vmem>>, %arg8: memref<1x128xf32, #tpu.memory_space<vmem>>, %arg9: memref<64x128xf32, #tpu.memory_space<vmem>>, %arg10: memref<64x64xbf16, #tpu.memory_space<vmem>>, %arg11: memref<64x128xf32, #tpu.memory_space<vmem>>, %arg12: memref<4x!tpu.dma_semaphore, #tpu.memory_space<semaphore_mem>>) attributes {dimension_semantics = [], scalar_prefetch = 0 : i64, scratch_operands = 3 : i64, tpu.core_type = #tpu.core_type<tc>} {
    %c0_i32 = arith.constant 0 : i32
    %c0_i32_0 = arith.constant 0 : i32
    %c0_i32_1 = arith.constant 0 : i32
    %0 = tpu.memref_slice %arg1[%c0_i32_0, %c0_i32_1] : memref<64x64xbf16, #tpu.memory_space<any>> -> memref<16x64xbf16, #tpu.memory_space<any>>
    %c0_i32_2 = arith.constant 0 : i32
    %c0_i32_3 = arith.constant 0 : i32
    %1 = tpu.memref_slice %arg10[%c0_i32_2, %c0_i32_3] : memref<64x64xbf16, #tpu.memory_space<vmem>> -> memref<16x64xbf16, #tpu.memory_space<vmem>>
    %2 = tpu.memref_slice %arg12[%c0_i32] : memref<4x!tpu.dma_semaphore, #tpu.memory_space<semaphore_mem>> -> memref<1x!tpu.dma_semaphore, #tpu.memory_space<semaphore_mem>>
    %3 = tpu.memref_squeeze %2 : memref<1x!tpu.dma_semaphore, #tpu.memory_space<semaphore_mem>> -> memref<!tpu.dma_semaphore, #tpu.memory_space<semaphore_mem>>
    tpu.enqueue_dma source(%0 : memref<16x64xbf16, #tpu.memory_space<any>>) target(%1 : memref<16x64xbf16, #tpu.memory_space<vmem>>) target_semaphore(%3 : memref<!tpu.dma_semaphore, #tpu.memory_space<semaphore_mem>>)
    %c1_i32 = arith.constant 1 : i32
    %c16_i32 = arith.constant 16 : i32
    %c0_i32_4 = arith.constant 0 : i32
    %4 = tpu.memref_slice %arg1[%c16_i32, %c0_i32_4] : memref<64x64xbf16, #tpu.memory_space<any>> -> memref<16x64xbf16, #tpu.memory_space<any>>
    %c16_i32_5 = arith.constant 16 : i32
    %c0_i32_6 = arith.constant 0 : i32
    %5 = tpu.memref_slice %arg10[%c16_i32_5, %c0_i32_6] : memref<64x64xbf16, #tpu.memory_space<vmem>> -> memref<16x64xbf16, #tpu.memory_space<vmem>>
    %6 = tpu.memref_slice %arg12[%c1_i32] : memref<4x!tpu.dma_semaphore, #tpu.memory_space<semaphore_mem>> -> memref<1x!tpu.dma_semaphore, #tpu.memory_space<semaphore_mem>>
    %7 = tpu.memref_squeeze %6 : memref<1x!tpu.dma_semaphore, #tpu.memory_space<semaphore_mem>> -> memref<!tpu.dma_semaphore, #tpu.memory_space<semaphore_mem>>
    tpu.enqueue_dma source(%4 : memref<16x64xbf16, #tpu.memory_space<any>>) target(%5 : memref<16x64xbf16, #tpu.memory_space<vmem>>) target_semaphore(%7 : memref<!tpu.dma_semaphore, #tpu.memory_space<semaphore_mem>>)
    %c2_i32 = arith.constant 2 : i32
    %c32_i32 = arith.constant 32 : i32
    %c0_i32_7 = arith.constant 0 : i32
    %8 = tpu.memref_slice %arg1[%c32_i32, %c0_i32_7] : memref<64x64xbf16, #tpu.memory_space<any>> -> memref<16x64xbf16, #tpu.memory_space<any>>
    %c32_i32_8 = arith.constant 32 : i32
    %c0_i32_9 = arith.constant 0 : i32
    %9 = tpu.memref_slice %arg10[%c32_i32_8, %c0_i32_9] : memref<64x64xbf16, #tpu.memory_space<vmem>> -> memref<16x64xbf16, #tpu.memory_space<vmem>>
    %10 = tpu.memref_slice %arg12[%c2_i32] : memref<4x!tpu.dma_semaphore, #tpu.memory_space<semaphore_mem>> -> memref<1x!tpu.dma_semaphore, #tpu.memory_space<semaphore_mem>>
    %11 = tpu.memref_squeeze %10 : memref<1x!tpu.dma_semaphore, #tpu.memory_space<semaphore_mem>> -> memref<!tpu.dma_semaphore, #tpu.memory_space<semaphore_mem>>
    tpu.enqueue_dma source(%8 : memref<16x64xbf16, #tpu.memory_space<any>>) target(%9 : memref<16x64xbf16, #tpu.memory_space<vmem>>) target_semaphore(%11 : memref<!tpu.dma_semaphore, #tpu.memory_space<semaphore_mem>>)
    %c3_i32 = arith.constant 3 : i32
    %c48_i32 = arith.constant 48 : i32
    %c0_i32_10 = arith.constant 0 : i32
    %12 = tpu.memref_slice %arg1[%c48_i32, %c0_i32_10] : memref<64x64xbf16, #tpu.memory_space<any>> -> memref<16x64xbf16, #tpu.memory_space<any>>
    %c48_i32_11 = arith.constant 48 : i32
    %c0_i32_12 = arith.constant 0 : i32
    %13 = tpu.memref_slice %arg10[%c48_i32_11, %c0_i32_12] : memref<64x64xbf16, #tpu.memory_space<vmem>> -> memref<16x64xbf16, #tpu.memory_space<vmem>>
    %14 = tpu.memref_slice %arg12[%c3_i32] : memref<4x!tpu.dma_semaphore, #tpu.memory_space<semaphore_mem>> -> memref<1x!tpu.dma_semaphore, #tpu.memory_space<semaphore_mem>>
    %15 = tpu.memref_squeeze %14 : memref<1x!tpu.dma_semaphore, #tpu.memory_space<semaphore_mem>> -> memref<!tpu.dma_semaphore, #tpu.memory_space<semaphore_mem>>
    tpu.enqueue_dma source(%12 : memref<16x64xbf16, #tpu.memory_space<any>>) target(%13 : memref<16x64xbf16, #tpu.memory_space<vmem>>) target_semaphore(%15 : memref<!tpu.dma_semaphore, #tpu.memory_space<semaphore_mem>>)
    %c0 = arith.constant 0 : index
    %c0_13 = arith.constant 0 : index
    %16 = vector.load %arg0[%c0, %c0_13] : memref<64x16xbf16, #tpu.memory_space<vmem>>, vector<64x16xbf16>
    %c0_14 = arith.constant 0 : index
    %c0_15 = arith.constant 0 : index
    %17 = vector.load %arg3[%c0_14, %c0_15] : memref<16x32xbf16, #tpu.memory_space<vmem>>, vector<16x32xbf16>
    %c0_16 = arith.constant 0 : index
    %c0_17 = arith.constant 0 : index
    %18 = vector.load %arg4[%c0_16, %c0_17] : memref<1x32xf32, #tpu.memory_space<vmem>>, vector<1x32xf32>
    %cst = arith.constant dense<0.000000e+00> : vector<64x32xf32>
    %19 = tpu.matmul %16, %17, %cst {dimension_numbers = #tpu.dot_dimension_numbers<[1], [0], [0], [1], [0, 0, 1, 1], [], []>} : vector<64x16xbf16>, vector<16x32xbf16>, vector<64x32xf32> -> vector<64x32xf32>
    %20 = vector.broadcast %18 : vector<1x32xf32> to vector<64x32xf32>
    %21 = arith.addf %19, %20 : vector<64x32xf32>
    %cst_18 = arith.constant 0.000000e+00 : f32
    %22 = vector.broadcast %cst_18 : f32 to vector<64x32xf32>
    %23 = arith.maximumf %21, %22 : vector<64x32xf32>
    %24 = arith.truncf %23 : vector<64x32xf32> to vector<64x32xbf16>
    %c0_19 = arith.constant 0 : index
    %c0_20 = arith.constant 0 : index
    %25 = vector.load %arg5[%c0_19, %c0_20] : memref<32x16xbf16, #tpu.memory_space<vmem>>, vector<32x16xbf16>
    %c0_21 = arith.constant 0 : index
    %c0_22 = arith.constant 0 : index
    %26 = vector.load %arg6[%c0_21, %c0_22] : memref<1x16xf32, #tpu.memory_space<vmem>>, vector<1x16xf32>
    %cst_23 = arith.constant dense<0.000000e+00> : vector<64x16xf32>
    %27 = tpu.matmul %24, %25, %cst_23 {dimension_numbers = #tpu.dot_dimension_numbers<[1], [0], [0], [1], [0, 0, 1, 1], [], []>} : vector<64x32xbf16>, vector<32x16xbf16>, vector<64x16xf32> -> vector<64x16xf32>
    %28 = vector.broadcast %26 : vector<1x16xf32> to vector<64x16xf32>
    %29 = arith.addf %27, %28 : vector<64x16xf32>
    %cst_24 = arith.constant 0.000000e+00 : f32
    %30 = vector.broadcast %cst_24 : f32 to vector<64x16xf32>
    %31 = arith.maximumf %29, %30 : vector<64x16xf32>
    %32 = arith.truncf %31 : vector<64x16xf32> to vector<64x16xbf16>
    %c0_25 = arith.constant 0 : index
    %c0_26 = arith.constant 0 : index
    %33 = vector.load %arg7[%c0_25, %c0_26] : memref<16x128xbf16, #tpu.memory_space<vmem>>, vector<16x128xbf16>
    %c0_27 = arith.constant 0 : index
    %c0_28 = arith.constant 0 : index
    %34 = vector.load %arg8[%c0_27, %c0_28] : memref<1x128xf32, #tpu.memory_space<vmem>>, vector<1x128xf32>
    %cst_29 = arith.constant dense<0.000000e+00> : vector<64x128xf32>
    %35 = tpu.matmul %32, %33, %cst_29 {dimension_numbers = #tpu.dot_dimension_numbers<[1], [0], [0], [1], [0, 0, 1, 1], [], []>} : vector<64x16xbf16>, vector<16x128xbf16>, vector<64x128xf32> -> vector<64x128xf32>
    %36 = vector.broadcast %34 : vector<1x128xf32> to vector<64x128xf32>
    %37 = arith.addf %35, %36 : vector<64x128xf32>
    %c0_30 = arith.constant 0 : index
    %c0_31 = arith.constant 0 : index
    %38 = vector.load %arg2[%c0_30, %c0_31] : memref<64x1xf32, #tpu.memory_space<vmem>>, vector<64x1xf32>
    %39 = vector.shape_cast %38 : vector<64x1xf32> to vector<64x1xf32>
    %40 = vector.broadcast %39 : vector<64x1xf32> to vector<64x128xf32>
    %cst_32 = arith.constant 1.000000e-01 : f32
    %41 = vector.broadcast %cst_32 : f32 to vector<64x128xf32>
    %42 = arith.mulf %41, %37 : vector<64x128xf32>
    %cst_33 = arith.constant 0.899999976 : f32
    %43 = vector.broadcast %cst_33 : f32 to vector<64x128xf32>
    %44 = arith.mulf %43, %40 : vector<64x128xf32>
    %45 = arith.mulf %40, %37 : vector<64x128xf32>
    %46 = arith.truncf %45 : vector<64x128xf32> to vector<64x128xbf16>
    %c0_i32_34 = arith.constant 0 : i32
    %c0_i32_35 = arith.constant 0 : i32
    %c0_i32_36 = arith.constant 0 : i32
    %47 = tpu.memref_slice %arg1[%c0_i32_35, %c0_i32_36] : memref<64x64xbf16, #tpu.memory_space<any>> -> memref<16x64xbf16, #tpu.memory_space<any>>
    %c0_i32_37 = arith.constant 0 : i32
    %c0_i32_38 = arith.constant 0 : i32
    %48 = tpu.memref_slice %arg10[%c0_i32_37, %c0_i32_38] : memref<64x64xbf16, #tpu.memory_space<vmem>> -> memref<16x64xbf16, #tpu.memory_space<vmem>>
    %49 = tpu.memref_slice %arg12[%c0_i32_34] : memref<4x!tpu.dma_semaphore, #tpu.memory_space<semaphore_mem>> -> memref<1x!tpu.dma_semaphore, #tpu.memory_space<semaphore_mem>>
    %50 = tpu.memref_squeeze %49 : memref<1x!tpu.dma_semaphore, #tpu.memory_space<semaphore_mem>> -> memref<!tpu.dma_semaphore, #tpu.memory_space<semaphore_mem>>
    tpu.wait_dma2 semaphore(%50 : memref<!tpu.dma_semaphore, #tpu.memory_space<semaphore_mem>>) src(%47 : memref<16x64xbf16, #tpu.memory_space<any>>) dst(%48 : memref<16x64xbf16, #tpu.memory_space<vmem>>)
    %c0_39 = arith.constant 0 : index
    %c0_40 = arith.constant 0 : index
    %51 = vector.load %arg10[%c0_39, %c0_40] : memref<64x64xbf16, #tpu.memory_space<vmem>>, vector<16x64xbf16>
    %cst_41 = arith.constant dense<0.000000e+00> : vector<16x128xf32>
    %52 = tpu.matmul %51, %46, %cst_41 {dimension_numbers = #tpu.dot_dimension_numbers<[1], [0], [0], [1], [0, 0, 1, 1], [], []>} : vector<16x64xbf16>, vector<64x128xbf16>, vector<16x128xf32> -> vector<16x128xf32>
    %53 = vector.extract_strided_slice %44 {offsets = [0, 0], sizes = [16, 128], strides = [1, 1]} : vector<64x128xf32> to vector<16x128xf32>
    %54 = arith.mulf %53, %52 : vector<16x128xf32>
    %55 = vector.extract_strided_slice %42 {offsets = [0, 0], sizes = [16, 128], strides = [1, 1]} : vector<64x128xf32> to vector<16x128xf32>
    %56 = arith.addf %54, %55 : vector<16x128xf32>
    %c0_42 = arith.constant 0 : index
    %c0_43 = arith.constant 0 : index
    %57 = vector.load %arg11[%c0_42, %c0_43] : memref<64x128xf32, #tpu.memory_space<vmem>>, vector<16x128xf32>
    tpu.vector_store %arg11[%c0_42, %c0_43], %56 {strides = array<i32>} : memref<64x128xf32, #tpu.memory_space<vmem>>, vector<16x128xf32>,
    %c1_i32_44 = arith.constant 1 : i32
    %c16_i32_45 = arith.constant 16 : i32
    %c0_i32_46 = arith.constant 0 : i32
    %58 = tpu.memref_slice %arg1[%c16_i32_45, %c0_i32_46] : memref<64x64xbf16, #tpu.memory_space<any>> -> memref<16x64xbf16, #tpu.memory_space<any>>
    %c16_i32_47 = arith.constant 16 : i32
    %c0_i32_48 = arith.constant 0 : i32
    %59 = tpu.memref_slice %arg10[%c16_i32_47, %c0_i32_48] : memref<64x64xbf16, #tpu.memory_space<vmem>> -> memref<16x64xbf16, #tpu.memory_space<vmem>>
    %60 = tpu.memref_slice %arg12[%c1_i32_44] : memref<4x!tpu.dma_semaphore, #tpu.memory_space<semaphore_mem>> -> memref<1x!tpu.dma_semaphore, #tpu.memory_space<semaphore_mem>>
    %61 = tpu.memref_squeeze %60 : memref<1x!tpu.dma_semaphore, #tpu.memory_space<semaphore_mem>> -> memref<!tpu.dma_semaphore, #tpu.memory_space<semaphore_mem>>
    tpu.wait_dma2 semaphore(%61 : memref<!tpu.dma_semaphore, #tpu.memory_space<semaphore_mem>>) src(%58 : memref<16x64xbf16, #tpu.memory_space<any>>) dst(%59 : memref<16x64xbf16, #tpu.memory_space<vmem>>)
    %c16 = arith.constant 16 : index
    %c0_49 = arith.constant 0 : index
    %62 = vector.load %arg10[%c16, %c0_49] : memref<64x64xbf16, #tpu.memory_space<vmem>>, vector<16x64xbf16>
    %cst_50 = arith.constant dense<0.000000e+00> : vector<16x128xf32>
    %63 = tpu.matmul %62, %46, %cst_50 {dimension_numbers = #tpu.dot_dimension_numbers<[1], [0], [0], [1], [0, 0, 1, 1], [], []>} : vector<16x64xbf16>, vector<64x128xbf16>, vector<16x128xf32> -> vector<16x128xf32>
    %64 = vector.extract_strided_slice %44 {offsets = [16, 0], sizes = [16, 128], strides = [1, 1]} : vector<64x128xf32> to vector<16x128xf32>
    %65 = arith.mulf %64, %63 : vector<16x128xf32>
    %66 = vector.extract_strided_slice %42 {offsets = [16, 0], sizes = [16, 128], strides = [1, 1]} : vector<64x128xf32> to vector<16x128xf32>
    %67 = arith.addf %65, %66 : vector<16x128xf32>
    %c16_51 = arith.constant 16 : index
    %c0_52 = arith.constant 0 : index
    %68 = vector.load %arg11[%c16_51, %c0_52] : memref<64x128xf32, #tpu.memory_space<vmem>>, vector<16x128xf32>
    tpu.vector_store %arg11[%c16_51, %c0_52], %67 {strides = array<i32>} : memref<64x128xf32, #tpu.memory_space<vmem>>, vector<16x128xf32>,
    %c2_i32_53 = arith.constant 2 : i32
    %c32_i32_54 = arith.constant 32 : i32
    %c0_i32_55 = arith.constant 0 : i32
    %69 = tpu.memref_slice %arg1[%c32_i32_54, %c0_i32_55] : memref<64x64xbf16, #tpu.memory_space<any>> -> memref<16x64xbf16, #tpu.memory_space<any>>
    %c32_i32_56 = arith.constant 32 : i32
    %c0_i32_57 = arith.constant 0 : i32
    %70 = tpu.memref_slice %arg10[%c32_i32_56, %c0_i32_57] : memref<64x64xbf16, #tpu.memory_space<vmem>> -> memref<16x64xbf16, #tpu.memory_space<vmem>>
    %71 = tpu.memref_slice %arg12[%c2_i32_53] : memref<4x!tpu.dma_semaphore, #tpu.memory_space<semaphore_mem>> -> memref<1x!tpu.dma_semaphore, #tpu.memory_space<semaphore_mem>>
    %72 = tpu.memref_squeeze %71 : memref<1x!tpu.dma_semaphore, #tpu.memory_space<semaphore_mem>> -> memref<!tpu.dma_semaphore, #tpu.memory_space<semaphore_mem>>
    tpu.wait_dma2 semaphore(%72 : memref<!tpu.dma_semaphore, #tpu.memory_space<semaphore_mem>>) src(%69 : memref<16x64xbf16, #tpu.memory_space<any>>) dst(%70 : memref<16x64xbf16, #tpu.memory_space<vmem>>)
    %c32 = arith.constant 32 : index
    %c0_58 = arith.constant 0 : index
    %73 = vector.load %arg10[%c32, %c0_58] : memref<64x64xbf16, #tpu.memory_space<vmem>>, vector<16x64xbf16>
    %cst_59 = arith.constant dense<0.000000e+00> : vector<16x128xf32>
    %74 = tpu.matmul %73, %46, %cst_59 {dimension_numbers = #tpu.dot_dimension_numbers<[1], [0], [0], [1], [0, 0, 1, 1], [], []>} : vector<16x64xbf16>, vector<64x128xbf16>, vector<16x128xf32> -> vector<16x128xf32>
    %75 = vector.extract_strided_slice %44 {offsets = [32, 0], sizes = [16, 128], strides = [1, 1]} : vector<64x128xf32> to vector<16x128xf32>
    %76 = arith.mulf %75, %74 : vector<16x128xf32>
    %77 = vector.extract_strided_slice %42 {offsets = [32, 0], sizes = [16, 128], strides = [1, 1]} : vector<64x128xf32> to vector<16x128xf32>
    %78 = arith.addf %76, %77 : vector<16x128xf32>
    %c32_60 = arith.constant 32 : index
    %c0_61 = arith.constant 0 : index
    %79 = vector.load %arg11[%c32_60, %c0_61] : memref<64x128xf32, #tpu.memory_space<vmem>>, vector<16x128xf32>
    tpu.vector_store %arg11[%c32_60, %c0_61], %78 {strides = array<i32>} : memref<64x128xf32, #tpu.memory_space<vmem>>, vector<16x128xf32>,
    %c3_i32_62 = arith.constant 3 : i32
    %c48_i32_63 = arith.constant 48 : i32
    %c0_i32_64 = arith.constant 0 : i32
    %80 = tpu.memref_slice %arg1[%c48_i32_63, %c0_i32_64] : memref<64x64xbf16, #tpu.memory_space<any>> -> memref<16x64xbf16, #tpu.memory_space<any>>
    %c48_i32_65 = arith.constant 48 : i32
    %c0_i32_66 = arith.constant 0 : i32
    %81 = tpu.memref_slice %arg10[%c48_i32_65, %c0_i32_66] : memref<64x64xbf16, #tpu.memory_space<vmem>> -> memref<16x64xbf16, #tpu.memory_space<vmem>>
    %82 = tpu.memref_slice %arg12[%c3_i32_62] : memref<4x!tpu.dma_semaphore, #tpu.memory_space<semaphore_mem>> -> memref<1x!tpu.dma_semaphore, #tpu.memory_space<semaphore_mem>>
    %83 = tpu.memref_squeeze %82 : memref<1x!tpu.dma_semaphore, #tpu.memory_space<semaphore_mem>> -> memref<!tpu.dma_semaphore, #tpu.memory_space<semaphore_mem>>
    tpu.wait_dma2 semaphore(%83 : memref<!tpu.dma_semaphore, #tpu.memory_space<semaphore_mem>>) src(%80 : memref<16x64xbf16, #tpu.memory_space<any>>) dst(%81 : memref<16x64xbf16, #tpu.memory_space<vmem>>)
    %c48 = arith.constant 48 : index
    %c0_67 = arith.constant 0 : index
    %84 = vector.load %arg10[%c48, %c0_67] : memref<64x64xbf16, #tpu.memory_space<vmem>>, vector<16x64xbf16>
    %cst_68 = arith.constant dense<0.000000e+00> : vector<16x128xf32>
    %85 = tpu.matmul %84, %46, %cst_68 {dimension_numbers = #tpu.dot_dimension_numbers<[1], [0], [0], [1], [0, 0, 1, 1], [], []>} : vector<16x64xbf16>, vector<64x128xbf16>, vector<16x128xf32> -> vector<16x128xf32>
    %86 = vector.extract_strided_slice %44 {offsets = [48, 0], sizes = [16, 128], strides = [1, 1]} : vector<64x128xf32> to vector<16x128xf32>
    %87 = arith.mulf %86, %85 : vector<16x128xf32>
    %88 = vector.extract_strided_slice %42 {offsets = [48, 0], sizes = [16, 128], strides = [1, 1]} : vector<64x128xf32> to vector<16x128xf32>
    %89 = arith.addf %87, %88 : vector<16x128xf32>
    %c48_69 = arith.constant 48 : index
    %c0_70 = arith.constant 0 : index
    %90 = vector.load %arg11[%c48_69, %c0_70] : memref<64x128xf32, #tpu.memory_space<vmem>>, vector<16x128xf32>
    tpu.vector_store %arg11[%c48_69, %c0_70], %89 {strides = array<i32>} : memref<64x128xf32, #tpu.memory_space<vmem>>, vector<16x128xf32>,
    %c0_71 = arith.constant 0 : index
    %c0_72 = arith.constant 0 : index
    %91 = vector.load %arg11[%c0_71, %c0_72] : memref<64x128xf32, #tpu.memory_space<vmem>>, vector<64x128xf32>
    %c0_73 = arith.constant 0 : index
    %c0_74 = arith.constant 0 : index
    %92 = vector.load %arg10[%c0_73, %c0_74] : memref<64x64xbf16, #tpu.memory_space<vmem>>, vector<64x64xbf16>
    %c0_i32_75 = arith.constant 0 : i32
    %93 = arith.mulf %40, %91 : vector<64x128xf32>
    %94 = arith.truncf %93 : vector<64x128xf32> to vector<64x128xbf16>
    %cst_76 = arith.constant dense<0.000000e+00> : vector<64x128xf32>
    %95 = tpu.matmul %92, %94, %cst_76 {dimension_numbers = #tpu.dot_dimension_numbers<[1], [0], [0], [1], [0, 0, 1, 1], [], []>} : vector<64x64xbf16>, vector<64x128xbf16>, vector<64x128xf32> -> vector<64x128xf32>
    %96 = arith.mulf %44, %95 : vector<64x128xf32>
    %97 = arith.addf %96, %42 : vector<64x128xf32>
    %c1_i32_77 = arith.constant 1 : i32
    %98 = arith.mulf %40, %97 : vector<64x128xf32>
    %99 = arith.truncf %98 : vector<64x128xf32> to vector<64x128xbf16>
    %cst_78 = arith.constant dense<0.000000e+00> : vector<64x128xf32>
    %100 = tpu.matmul %92, %99, %cst_78 {dimension_numbers = #tpu.dot_dimension_numbers<[1], [0], [0], [1], [0, 0, 1, 1], [], []>} : vector<64x64xbf16>, vector<64x128xbf16>, vector<64x128xf32> -> vector<64x128xf32>
    %101 = arith.mulf %44, %100 : vector<64x128xf32>
    %102 = arith.addf %101, %42 : vector<64x128xf32>
    %c2_i32_79 = arith.constant 2 : i32
    %103 = arith.mulf %40, %102 : vector<64x128xf32>
    %104 = arith.truncf %103 : vector<64x128xf32> to vector<64x128xbf16>
    %cst_80 = arith.constant dense<0.000000e+00> : vector<64x128xf32>
    %105 = tpu.matmul %92, %104, %cst_80 {dimension_numbers = #tpu.dot_dimension_numbers<[1], [0], [0], [1], [0, 0, 1, 1], [], []>} : vector<64x64xbf16>, vector<64x128xbf16>, vector<64x128xf32> -> vector<64x128xf32>
    %106 = arith.mulf %44, %105 : vector<64x128xf32>
    %107 = arith.addf %106, %42 : vector<64x128xf32>
    %c3_i32_81 = arith.constant 3 : i32
    %108 = arith.mulf %40, %107 : vector<64x128xf32>
    %109 = arith.truncf %108 : vector<64x128xf32> to vector<64x128xbf16>
    %cst_82 = arith.constant dense<0.000000e+00> : vector<64x128xf32>
    %110 = tpu.matmul %92, %109, %cst_82 {dimension_numbers = #tpu.dot_dimension_numbers<[1], [0], [0], [1], [0, 0, 1, 1], [], []>} : vector<64x64xbf16>, vector<64x128xbf16>, vector<64x128xf32> -> vector<64x128xf32>
    %111 = arith.mulf %44, %110 : vector<64x128xf32>
    %112 = arith.addf %111, %42 : vector<64x128xf32>
    %c4_i32 = arith.constant 4 : i32
    %113 = arith.mulf %40, %112 : vector<64x128xf32>
    %114 = arith.truncf %113 : vector<64x128xf32> to vector<64x128xbf16>
    %cst_83 = arith.constant dense<0.000000e+00> : vector<64x128xf32>
    %115 = tpu.matmul %92, %114, %cst_83 {dimension_numbers = #tpu.dot_dimension_numbers<[1], [0], [0], [1], [0, 0, 1, 1], [], []>} : vector<64x64xbf16>, vector<64x128xbf16>, vector<64x128xf32> -> vector<64x128xf32>
    %116 = arith.mulf %44, %115 : vector<64x128xf32>
    %117 = arith.addf %116, %42 : vector<64x128xf32>
    %c5_i32 = arith.constant 5 : i32
    %118 = arith.mulf %40, %117 : vector<64x128xf32>
    %119 = arith.truncf %118 : vector<64x128xf32> to vector<64x128xbf16>
    %cst_84 = arith.constant dense<0.000000e+00> : vector<64x128xf32>
    %120 = tpu.matmul %92, %119, %cst_84 {dimension_numbers = #tpu.dot_dimension_numbers<[1], [0], [0], [1], [0, 0, 1, 1], [], []>} : vector<64x64xbf16>, vector<64x128xbf16>, vector<64x128xf32> -> vector<64x128xf32>
    %121 = arith.mulf %44, %120 : vector<64x128xf32>
    %122 = arith.addf %121, %42 : vector<64x128xf32>
    %c6_i32 = arith.constant 6 : i32
    %123 = arith.mulf %40, %122 : vector<64x128xf32>
    %124 = arith.truncf %123 : vector<64x128xf32> to vector<64x128xbf16>
    %cst_85 = arith.constant dense<0.000000e+00> : vector<64x128xf32>
    %125 = tpu.matmul %92, %124, %cst_85 {dimension_numbers = #tpu.dot_dimension_numbers<[1], [0], [0], [1], [0, 0, 1, 1], [], []>} : vector<64x64xbf16>, vector<64x128xbf16>, vector<64x128xf32> -> vector<64x128xf32>
    %126 = arith.mulf %44, %125 : vector<64x128xf32>
    %127 = arith.addf %126, %42 : vector<64x128xf32>
    %c7_i32 = arith.constant 7 : i32
    %128 = arith.mulf %40, %127 : vector<64x128xf32>
    %129 = arith.truncf %128 : vector<64x128xf32> to vector<64x128xbf16>
    %cst_86 = arith.constant dense<0.000000e+00> : vector<64x128xf32>
    %130 = tpu.matmul %92, %129, %cst_86 {dimension_numbers = #tpu.dot_dimension_numbers<[1], [0], [0], [1], [0, 0, 1, 1], [], []>} : vector<64x64xbf16>, vector<64x128xbf16>, vector<64x128xf32> -> vector<64x128xf32>
    %131 = arith.mulf %44, %130 : vector<64x128xf32>
    %132 = arith.addf %131, %42 : vector<64x128xf32>
    %c8_i32 = arith.constant 8 : i32
    %133 = arith.mulf %40, %132 : vector<64x128xf32>
    %134 = arith.truncf %133 : vector<64x128xf32> to vector<64x128xbf16>
    %cst_87 = arith.constant dense<0.000000e+00> : vector<64x128xf32>
    %135 = tpu.matmul %92, %134, %cst_87 {dimension_numbers = #tpu.dot_dimension_numbers<[1], [0], [0], [1], [0, 0, 1, 1], [], []>} : vector<64x64xbf16>, vector<64x128xbf16>, vector<64x128xf32> -> vector<64x128xf32>
    %136 = arith.mulf %44, %135 : vector<64x128xf32>
    %137 = arith.addf %136, %42 : vector<64x128xf32>
    %c0_88 = arith.constant 0 : index
    %c0_89 = arith.constant 0 : index
    %138 = vector.load %arg9[%c0_88, %c0_89] : memref<64x128xf32, #tpu.memory_space<vmem>>, vector<64x128xf32>
    tpu.vector_store %arg9[%c0_88, %c0_89], %137 {strides = array<i32>} : memref<64x128xf32, #tpu.memory_space<vmem>>, vector<64x128xf32>,
    return
  }
}

</mosaic_0001>

<llo_original>
// kernel: tpu_custom_call.1
$region0: #{tpu_custom_call.1}
  #allocation0 [shape = 'u32[]', space=smem, size = 0x4, offset = 0x4, fixed_abs, tag = 'smem constant byte address 0x4 - core index']
  #allocation1 [shape = 'u32[144,128]{1,0:T(1,128)}', space=vmem, size = 0x12000, scoped, tag = 'internal scratch']
  #allocation2 [shape = 'bf16[64,64]{1,0:T(16,128)(2,1)}', space=vmem, size = 0x4000, scoped, tag = 'scratch operand']
  #allocation3 [shape = 'f32[64,128]{1,0:T(8,128)}', space=vmem, size = 0x8000, scoped, tag = 'scratch operand']
  #allocation4 [shape = 's32[4]{0}', space=sflag, size = 0x10, scoped, tag = 'scratch operand']
  #allocation7 [shape = 's32[]', space=sflag, size = 0x4, offset = 0, fixed_abs, tag = 'sflag constant byte address 0x0 - dummy sync flag']
  #allocation8 [shape = 's32[]', space=sflag, size = 0x4, offset = 0, fixed_abs, tag = 'sflag constant byte address 0x0 - dummy sync flag']
  #allocation9 [shape = 's32[]', space=sflag, size = 0x4, offset = 0, fixed_abs, tag = 'sflag constant byte address 0x0 - dummy sync flag']
  #allocation10 [shape = 's32[]', space=sflag, size = 0x4, offset = 0, fixed_abs, tag = 'sflag constant byte address 0x0 - dummy sync flag']
  %s0 = inlined_call_operand.vmem [shape: bf16[64,16], index: 0, kind: input, shape index: {}]
  %s1 = inlined_call_operand.vmem [shape: bf16[64,64], index: 1, kind: input, shape index: {}]
  %s2 = inlined_call_operand.vmem [shape: f32[64,1], index: 2, kind: input, shape index: {}]
  %s3 = inlined_call_operand.vmem [shape: bf16[16,32], index: 3, kind: input, shape index: {}]
  %s4 = inlined_call_operand.vmem [shape: f32[1,32], index: 4, kind: input, shape index: {}]
  %s5 = inlined_call_operand.vmem [shape: bf16[32,16], index: 5, kind: input, shape index: {}]
  %s6 = inlined_call_operand.vmem [shape: f32[1,16], index: 6, kind: input, shape index: {}]
  %s7 = inlined_call_operand.vmem [shape: bf16[16,128], index: 7, kind: input, shape index: {}]
  %s8 = inlined_call_operand.vmem [shape: f32[1,128], index: 8, kind: input, shape index: {}]
  %s9 = inlined_call_operand.hbm [shape: f32[64,128], index: 9, kind: output, shape index: {}]
  %s10 = sld [smem:[#allocation0]]
  $region178: #{tpu_custom_call.1} parent=0
    _
  %s12 = ssub.s32 1, %s10
  %s13 = scalar_select 0, %s12, %s10
  $region1: #{tpu_custom_call.1} parent=0
    #allocation5 [shape = 'u8[32768]{0}', space=vmem, size = 0x8000, scoped, tag = 'output window, operand 0, single buffered']
    #allocation6 [shape = 's32[1]{0}', space=sflag, size = 0x4, scoped, tag = 'scoped memory for tpu_custom_call.1']
    %14 = vsyncpa [#allocation6], 0
    // Predicated region
    $region2: #{tpu_custom_call.1} parent=1 // pred_check
      _
    $region3: #{tpu_custom_call.1} parent=1 // pred_check_branch
      %16 = sbr.rel (0) target = $region5
    $region4: #{tpu_custom_call.1} parent=1 // pred_region
      _
    $region5: #{tpu_custom_call.1} parent=1 // pred_fallthru
      _
    // Predicated region
    $region6: #{tpu_custom_call.1} parent=1 // pred_check
      _
    $region7: #{tpu_custom_call.1} parent=1 // pred_check_branch
      %18 = sbr.rel (0) target = $region9
    $region8: #{tpu_custom_call.1} parent=1 // pred_region
      _
    $region9: #{tpu_custom_call.1} parent=1 // pred_fallthru
      _
    // Predicated region
    $region10: #{tpu_custom_call.1} parent=1 // pred_check
      _
    $region11: #{tpu_custom_call.1} parent=1 // pred_check_branch
      %20 = sbr.rel (0) target = $region13
    $region12: #{tpu_custom_call.1} parent=1 // pred_region
      _
    $region13: #{tpu_custom_call.1} parent=1 // pred_fallthru
      _
    // Predicated region
    $region14: #{tpu_custom_call.1} parent=1 // pred_check
      _
    $region15: #{tpu_custom_call.1} parent=1 // pred_check_branch
      %22 = sbr.rel (0) target = $region17
    $region16: #{tpu_custom_call.1} parent=1 // pred_region
      _
    $region17: #{tpu_custom_call.1} parent=1 // pred_fallthru
      _
    // Predicated region
    $region18: #{tpu_custom_call.1} parent=1 // pred_check
      _
    $region19: #{tpu_custom_call.1} parent=1 // pred_check_branch
      %24 = sbr.rel (0) target = $region21
    $region20: #{tpu_custom_call.1} parent=1 // pred_region
      _
    $region21: #{tpu_custom_call.1} parent=1 // pred_fallthru
      _
    // Predicated region
    $region22: #{tpu_custom_call.1} parent=1 // pred_check
      _
    $region23: #{tpu_custom_call.1} parent=1 // pred_check_branch
      %26 = sbr.rel (0) target = $region25
    $region24: #{tpu_custom_call.1} parent=1 // pred_region
      _
    $region25: #{tpu_custom_call.1} parent=1 // pred_fallthru
      _
    // Predicated region
    $region26: #{tpu_custom_call.1} parent=1 // pred_check
      _
    $region27: #{tpu_custom_call.1} parent=1 // pred_check_branch
      %28 = sbr.rel (0) target = $region29
    $region28: #{tpu_custom_call.1} parent=1 // pred_region
      _
    $region29: #{tpu_custom_call.1} parent=1 // pred_fallthru
      _
    // Predicated region
    $region30: #{tpu_custom_call.1} parent=1 // pred_check
      _
    $region31: #{tpu_custom_call.1} parent=1 // pred_check_branch
      %30 = sbr.rel (0) target = $region33
    $region32: #{tpu_custom_call.1} parent=1 // pred_region
      _
    $region33: #{tpu_custom_call.1} parent=1 // pred_fallthru
      _
    %p33 = scmp.lt.u32.totalorder 8, 8
    %p34 = pneg %p33
    // Predicated region
    $region34: #{tpu_custom_call.1} parent=1 // pred_check
      _
    $region35: #{tpu_custom_call.1} parent=1 // pred_check_branch
      %36 = sbr.rel (%p33) target = $region37
    $region36: #{tpu_custom_call.1} parent=1 // pred_region
      %s51 = sand.u32 8, 7
      %p52 = scmp.eq.s32.totalorder %s51, 0
      // Predicated region
      $region49: #{tpu_custom_call.1} parent=36 // pred_check
        %p53 = pneg %p52
      $region50: #{tpu_custom_call.1} parent=36 // pred_check_branch
        %55 = sbr.rel (%p53) target = $region52
      $region51: #{tpu_custom_call.1} parent=36 // pred_region
        loop: start=0, step=1, limit=1
        $region53: #{tpu_custom_call.1} parent=51 // loop_pre_header
          _
        $region54: #{tpu_custom_call.1} parent=51 // loop_header
          %s57 = sphi 0, %s61
          %p58 = scmp.ge.s32.totalorder %s57, 1
          %s62 = sphi %s1, %s1
          %s63 = sphi [#allocation2], [#allocation2]
        $region55: #{tpu_custom_call.1} parent=51 // loop_header_branch
          %60 = sbr.rel (%p58) target = $region59
        $region56: #{tpu_custom_call.1} parent=51 // loop_body
          %v64 = vld [vmem:[%s62] sm:$0xff]
          %65 = vst [vmem:[%s63] sm:$0xff] %v64
        $region57: #{tpu_custom_call.1} parent=51 // loop_footer
          %s61 = sadd.s32 1, %s57
        $region58: #{tpu_custom_call.1} parent=51 // loop_footer_branch
          %56 = sbr.rel target = $region54
        $region59: #{tpu_custom_call.1} parent=51 // loop_exit
          _
      $region52: #{tpu_custom_call.1} parent=36 // pred_fallthru
        _
      %p66 = pneg %p52
      // Predicated region
      $region60: #{tpu_custom_call.1} parent=36 // pred_check
        _
      $region61: #{tpu_custom_call.1} parent=36 // pred_check_branch
        %68 = sbr.rel (%p52) target = $region63
      $region62: #{tpu_custom_call.1} parent=36 // pred_region
        %s69 = sand.u32 8, 7
      $region63: #{tpu_custom_call.1} parent=36 // pred_fallthru
        _
    $region37: #{tpu_custom_call.1} parent=1 // pred_fallthru
      _
    // Predicated region
    $region38: #{tpu_custom_call.1} parent=1 // pred_check
      %p37 = pneg %p33
    $region39: #{tpu_custom_call.1} parent=1 // pred_check_branch
      %39 = sbr.rel (%p37) target = $region41
    $region40: #{tpu_custom_call.1} parent=1 // pred_region
      %s40 = sshllo.u32 0, 8
      loop: start=0, step=1, limit=1
      $region42: #{tpu_custom_call.1} parent=40 // loop_pre_header
        _
      $region43: #{tpu_custom_call.1} parent=40 // loop_header
        %s42 = sphi 0, %s46
        %p43 = scmp.ge.s32.totalorder %s42, 1
        %s47 = sphi %s1, %s1
        %s48 = sphi [#allocation2], [#allocation2]
      $region44: #{tpu_custom_call.1} parent=40 // loop_header_branch
        %45 = sbr.rel (%p43) target = $region48
      $region45: #{tpu_custom_call.1} parent=40 // loop_body
        %v49 = vld [vmem:[%s47] sm:%s40]
        %50 = vst [vmem:[%s48] sm:%s40] %v49
      $region46: #{tpu_custom_call.1} parent=40 // loop_footer
        %s46 = sadd.s32 1, %s42
      $region47: #{tpu_custom_call.1} parent=40 // loop_footer_branch
        %41 = sbr.rel target = $region43
      $region48: #{tpu_custom_call.1} parent=40 // loop_exit
        _
    $region41: #{tpu_custom_call.1} parent=1 // pred_fallthru
      _
    // Predicated region
    $region64: #{tpu_custom_call.1} parent=1 // pred_check
      _
    $region65: #{tpu_custom_call.1} parent=1 // pred_check_branch
      %72 = sbr.rel (0) target = $region67
    $region66: #{tpu_custom_call.1} parent=1 // pred_region
      %73 = vsyncadd [#allocation4], 128
    $region67: #{tpu_custom_call.1} parent=1 // pred_fallthru
      _
    %s74 = scalar_lea.vmem %s1, 8
    %s75 = scalar_lea.vmem [#allocation2], 8
    %s76 = scalar_lea.sflag [#allocation4], 1
    %p78 = scmp.lt.u32.totalorder 8, 8
    %p79 = pneg %p78
    // Predicated region
    $region68: #{tpu_custom_call.1} parent=1 // pred_check
      _
    $region69: #{tpu_custom_call.1} parent=1 // pred_check_branch
      %81 = sbr.rel (%p78) target = $region71
    $region70: #{tpu_custom_call.1} parent=1 // pred_region
      %s96 = sand.u32 8, 7
      %p97 = scmp.eq.s32.totalorder %s96, 0
      // Predicated region
      $region83: #{tpu_custom_call.1} parent=70 // pred_check
        %p98 = pneg %p97
      $region84: #{tpu_custom_call.1} parent=70 // pred_check_branch
        %100 = sbr.rel (%p98) target = $region86
      $region85: #{tpu_custom_call.1} parent=70 // pred_region
        loop: start=0, step=1, limit=1
        $region87: #{tpu_custom_call.1} parent=85 // loop_pre_header
          _
        $region88: #{tpu_custom_call.1} parent=85 // loop_header
          %s102 = sphi 0, %s106
          %p103 = scmp.ge.s32.totalorder %s102, 1
          %s107 = sphi %s74, %s74
          %s108 = sphi %s75, %s75
        $region89: #{tpu_custom_call.1} parent=85 // loop_header_branch
          %105 = sbr.rel (%p103) target = $region93
        $region90: #{tpu_custom_call.1} parent=85 // loop_body
          %v109 = vld [vmem:[%s107] sm:$0xff]
          %110 = vst [vmem:[%s108] sm:$0xff] %v109
        $region91: #{tpu_custom_call.1} parent=85 // loop_footer
          %s106 = sadd.s32 1, %s102
        $region92: #{tpu_custom_call.1} parent=85 // loop_footer_branch
          %101 = sbr.rel target = $region88
        $region93: #{tpu_custom_call.1} parent=85 // loop_exit
          _
      $region86: #{tpu_custom_call.1} parent=70 // pred_fallthru
        _
      %p111 = pneg %p97
      // Predicated region
      $region94: #{tpu_custom_call.1} parent=70 // pred_check
        _
      $region95: #{tpu_custom_call.1} parent=70 // pred_check_branch
        %113 = sbr.rel (%p97) target = $region97
      $region96: #{tpu_custom_call.1} parent=70 // pred_region
        %s114 = sand.u32 8, 7
      $region97: #{tpu_custom_call.1} parent=70 // pred_fallthru
        _
    $region71: #{tpu_custom_call.1} parent=1 // pred_fallthru
      _
    // Predicated region
    $region72: #{tpu_custom_call.1} parent=1 // pred_check
      %p82 = pneg %p78
    $region73: #{tpu_custom_call.1} parent=1 // pred_check_branch
      %84 = sbr.rel (%p82) target = $region75
    $region74: #{tpu_custom_call.1} parent=1 // pred_region
      %s85 = sshllo.u32 0, 8
      loop: start=0, step=1, limit=1
      $region76: #{tpu_custom_call.1} parent=74 // loop_pre_header
        _
      $region77: #{tpu_custom_call.1} parent=74 // loop_header
        %s87 = sphi 0, %s91
        %p88 = scmp.ge.s32.totalorder %s87, 1
        %s92 = sphi %s74, %s74
        %s93 = sphi %s75, %s75
      $region78: #{tpu_custom_call.1} parent=74 // loop_header_branch
        %90 = sbr.rel (%p88) target = $region82
      $region79: #{tpu_custom_call.1} parent=74 // loop_body
        %v94 = vld [vmem:[%s92] sm:%s85]
        %95 = vst [vmem:[%s93] sm:%s85] %v94
      $region80: #{tpu_custom_call.1} parent=74 // loop_footer
        %s91 = sadd.s32 1, %s87
      $region81: #{tpu_custom_call.1} parent=74 // loop_footer_branch
        %86 = sbr.rel target = $region77
      $region82: #{tpu_custom_call.1} parent=74 // loop_exit
        _
    $region75: #{tpu_custom_call.1} parent=1 // pred_fallthru
      _
    // Predicated region
    $region98: #{tpu_custom_call.1} parent=1 // pred_check
      _
    $region99: #{tpu_custom_call.1} parent=1 // pred_check_branch
      %117 = sbr.rel (0) target = $region101
    $region100: #{tpu_custom_call.1} parent=1 // pred_region
      %118 = vsyncadd %s76, 128
    $region101: #{tpu_custom_call.1} parent=1 // pred_fallthru
      _
    %s119 = scalar_lea.vmem %s1, 16
    %s120 = scalar_lea.vmem [#allocation2], 16
    %s121 = scalar_lea.sflag [#allocation4], 2
    %p123 = scmp.lt.u32.totalorder 8, 8
    %p124 = pneg %p123
    // Predicated region
    $region102: #{tpu_custom_call.1} parent=1 // pred_check
      _
    $region103: #{tpu_custom_call.1} parent=1 // pred_check_branch
      %126 = sbr.rel (%p123) target = $region105
    $region104: #{tpu_custom_call.1} parent=1 // pred_region
      %s141 = sand.u32 8, 7
      %p142 = scmp.eq.s32.totalorder %s141, 0
      // Predicated region
      $region117: #{tpu_custom_call.1} parent=104 // pred_check
        %p143 = pneg %p142
      $region118: #{tpu_custom_call.1} parent=104 // pred_check_branch
        %145 = sbr.rel (%p143) target = $region120
      $region119: #{tpu_custom_call.1} parent=104 // pred_region
        loop: start=0, step=1, limit=1
        $region121: #{tpu_custom_call.1} parent=119 // loop_pre_header
          _
        $region122: #{tpu_custom_call.1} parent=119 // loop_header
          %s147 = sphi 0, %s151
          %p148 = scmp.ge.s32.totalorder %s147, 1
          %s152 = sphi %s119, %s119
          %s153 = sphi %s120, %s120
        $region123: #{tpu_custom_call.1} parent=119 // loop_header_branch
          %150 = sbr.rel (%p148) target = $region127
        $region124: #{tpu_custom_call.1} parent=119 // loop_body
          %v154 = vld [vmem:[%s152] sm:$0xff]
          %155 = vst [vmem:[%s153] sm:$0xff] %v154
        $region125: #{tpu_custom_call.1} parent=119 // loop_footer
          %s151 = sadd.s32 1, %s147
        $region126: #{tpu_custom_call.1} parent=119 // loop_footer_branch
          %146 = sbr.rel target = $region122
        $region127: #{tpu_custom_call.1} parent=119 // loop_exit
          _
      $region120: #{tpu_custom_call.1} parent=104 // pred_fallthru
        _
      %p156 = pneg %p142
      // Predicated region
      $region128: #{tpu_custom_call.1} parent=104 // pred_check
        _
      $region129: #{tpu_custom_call.1} parent=104 // pred_check_branch
        %158 = sbr.rel (%p142) target = $region131
      $region130: #{tpu_custom_call.1} parent=104 // pred_region
        %s159 = sand.u32 8, 7
      $region131: #{tpu_custom_call.1} parent=104 // pred_fallthru
        _
    $region105: #{tpu_custom_call.1} parent=1 // pred_fallthru
      _
    // Predicated region
    $region106: #{tpu_custom_call.1} parent=1 // pred_check
      %p127 = pneg %p123
    $region107: #{tpu_custom_call.1} parent=1 // pred_check_branch
      %129 = sbr.rel (%p127) target = $region109
    $region108: #{tpu_custom_call.1} parent=1 // pred_region
      %s130 = sshllo.u32 0, 8
      loop: start=0, step=1, limit=1
      $region110: #{tpu_custom_call.1} parent=108 // loop_pre_header
        _
      $region111: #{tpu_custom_call.1} parent=108 // loop_header
        %s132 = sphi 0, %s136
        %p133 = scmp.ge.s32.totalorder %s132, 1
        %s137 = sphi %s119, %s119
        %s138 = sphi %s120, %s120
      $region112: #{tpu_custom_call.1} parent=108 // loop_header_branch
        %135 = sbr.rel (%p133) target = $region116
      $region113: #{tpu_custom_call.1} parent=108 // loop_body
        %v139 = vld [vmem:[%s137] sm:%s130]
        %140 = vst [vmem:[%s138] sm:%s130] %v139
      $region114: #{tpu_custom_call.1} parent=108 // loop_footer
        %s136 = sadd.s32 1, %s132
      $region115: #{tpu_custom_call.1} parent=108 // loop_footer_branch
        %131 = sbr.rel target = $region111
      $region116: #{tpu_custom_call.1} parent=108 // loop_exit
        _
    $region109: #{tpu_custom_call.1} parent=1 // pred_fallthru
      _
    // Predicated region
    $region132: #{tpu_custom_call.1} parent=1 // pred_check
      _
    $region133: #{tpu_custom_call.1} parent=1 // pred_check_branch
      %162 = sbr.rel (0) target = $region135
    $region134: #{tpu_custom_call.1} parent=1 // pred_region
      %163 = vsyncadd %s121, 128
    $region135: #{tpu_custom_call.1} parent=1 // pred_fallthru
      _
    %s164 = scalar_lea.vmem %s1, 24
    %s165 = scalar_lea.vmem [#allocation2], 24
    %s166 = scalar_lea.sflag [#allocation4], 3
    %p168 = scmp.lt.u32.totalorder 8, 8
    %p169 = pneg %p168
    // Predicated region
    $region136: #{tpu_custom_call.1} parent=1 // pred_check
      _
    $region137: #{tpu_custom_call.1} parent=1 // pred_check_branch
      %171 = sbr.rel (%p168) target = $region139
    $region138: #{tpu_custom_call.1} parent=1 // pred_region
      %s186 = sand.u32 8, 7
      %p187 = scmp.eq.s32.totalorder %s186, 0
      // Predicated region
      $region151: #{tpu_custom_call.1} parent=138 // pred_check
        %p188 = pneg %p187
      $region152: #{tpu_custom_call.1} parent=138 // pred_check_branch
        %190 = sbr.rel (%p188) target = $region154
      $region153: #{tpu_custom_call.1} parent=138 // pred_region
        loop: start=0, step=1, limit=1
        $region155: #{tpu_custom_call.1} parent=153 // loop_pre_header
          _
        $region156: #{tpu_custom_call.1} parent=153 // loop_header
          %s192 = sphi 0, %s196
          %p193 = scmp.ge.s32.totalorder %s192, 1
          %s197 = sphi %s164, %s164
          %s198 = sphi %s165, %s165
        $region157: #{tpu_custom_call.1} parent=153 // loop_header_branch
          %195 = sbr.rel (%p193) target = $region161
        $region158: #{tpu_custom_call.1} parent=153 // loop_body
          %v199 = vld [vmem:[%s197] sm:$0xff]
          %200 = vst [vmem:[%s198] sm:$0xff] %v199
        $region159: #{tpu_custom_call.1} parent=153 // loop_footer
          %s196 = sadd.s32 1, %s192
        $region160: #{tpu_custom_call.1} parent=153 // loop_footer_branch
          %191 = sbr.rel target = $region156
        $region161: #{tpu_custom_call.1} parent=153 // loop_exit
          _
      $region154: #{tpu_custom_call.1} parent=138 // pred_fallthru
        _
      %p201 = pneg %p187
      // Predicated region
      $region162: #{tpu_custom_call.1} parent=138 // pred_check
        _
      $region163: #{tpu_custom_call.1} parent=138 // pred_check_branch
        %203 = sbr.rel (%p187) target = $region165
      $region164: #{tpu_custom_call.1} parent=138 // pred_region
        %s204 = sand.u32 8, 7
      $region165: #{tpu_custom_call.1} parent=138 // pred_fallthru
        _
    $region139: #{tpu_custom_call.1} parent=1 // pred_fallthru
      _
    // Predicated region
    $region140: #{tpu_custom_call.1} parent=1 // pred_check
      %p172 = pneg %p168
    $region141: #{tpu_custom_call.1} parent=1 // pred_check_branch
      %174 = sbr.rel (%p172) target = $region143
    $region142: #{tpu_custom_call.1} parent=1 // pred_region
      %s175 = sshllo.u32 0, 8
      loop: start=0, step=1, limit=1
      $region144: #{tpu_custom_call.1} parent=142 // loop_pre_header
        _
      $region145: #{tpu_custom_call.1} parent=142 // loop_header
        %s177 = sphi 0, %s181
        %p178 = scmp.ge.s32.totalorder %s177, 1
        %s182 = sphi %s164, %s164
        %s183 = sphi %s165, %s165
      $region146: #{tpu_custom_call.1} parent=142 // loop_header_branch
        %180 = sbr.rel (%p178) target = $region150
      $region147: #{tpu_custom_call.1} parent=142 // loop_body
        %v184 = vld [vmem:[%s182] sm:%s175]
        %185 = vst [vmem:[%s183] sm:%s175] %v184
      $region148: #{tpu_custom_call.1} parent=142 // loop_footer
        %s181 = sadd.s32 1, %s177
      $region149: #{tpu_custom_call.1} parent=142 // loop_footer_branch
        %176 = sbr.rel target = $region145
      $region150: #{tpu_custom_call.1} parent=142 // loop_exit
        _
    $region143: #{tpu_custom_call.1} parent=1 // pred_fallthru
      _
    // Predicated region
    $region166: #{tpu_custom_call.1} parent=1 // pred_check
      _
    $region167: #{tpu_custom_call.1} parent=1 // pred_check_branch
      %207 = sbr.rel (0) target = $region169
    $region168: #{tpu_custom_call.1} parent=1 // pred_region
      %208 = vsyncadd %s166, 128
    $region169: #{tpu_custom_call.1} parent=1 // pred_fallthru
      _
    %v209 = vld [vmem:[%s0] sm:$0xf]
    %v210 = vld [vmem:[%s0 + $0x4] sm:$0xf]
    %v211 = vld [vmem:[%s0 + $0x8] sm:$0xf]
    %v212 = vld [vmem:[%s0 + $0xc] sm:$0xf]
    %v213 = vld [vmem:[%s0 + $0x10] sm:$0xf]
    %v214 = vld [vmem:[%s0 + $0x14] sm:$0xf]
    %v215 = vld [vmem:[%s0 + $0x18] sm:$0xf]
    %v216 = vld [vmem:[%s0 + $0x1c] sm:$0xf]
    %v217 = vld [vmem:[%s3] sm:$0xf]
    %v218 = vld [vmem:[%s3 + $0x4] sm:$0xf]
    %v219 = vld [vmem:[%s4] sm:$0x1]
    %v221 = vlaneseq
    %v222 = vshrl.u32 %v221, 7
    %v223 = vsub.s32 0, %v222
    %v224 = vrot.slane %v219, %v223
    %v234 = vunpack.c.l.b16 %v209
    %v235 = vunpack.c.l.b16 %v210
    %v236 = vunpack.c.l.b16 %v211
    %v237 = vunpack.c.l.b16 %v212
    %v238 = vunpack.c.l.b16 %v213
    %v239 = vunpack.c.l.b16 %v214
    %v240 = vunpack.c.l.b16 %v215
    %v241 = vunpack.c.l.b16 %v216
    %v242 = vpack.c.b16 %v235, %v234
    %v243 = vpack.c.b16 %v237, %v236
    %v244 = vpack.c.b16 %v239, %v238
    %v245 = vpack.c.b16 %v241, %v240
    %v248 = vunpack.c.l.b16 %v217
    %v249 = vunpack.c.l.b16 %v218
    %v250 = vpack.c.b16 %v249, %v248
    %vm252 = vcmask 130048
    %v254 = vsel %vm252, %v242, 0
    %v257 = vsel %vm252, %v243, 0
    %v260 = vsel %vm252, %v244, 0
    %v263 = vsel %vm252, %v245, 0
    %265 = vmatprep.subr.bf16.mxu0 0
    %266 = vmatpush1.bf16.msra.mxu0 %v250
    %267 = vmatprep.subr.bf16.mxu0 0
    %268 = vmatpush1.bf16.msra.mxu0 0
    %269 = vmatprep.subr.bf16.mxu0 0
    %270 = vmatpush1.bf16.msra.mxu0 0
    %271 = vmatprep.subr.bf16.mxu0 0
    %272 = vmatpush1.bf16.msra.mxu0 0
    %273 = vmatprep.subr.bf16.mxu0 0
    %274 = vmatpush1.bf16.msra.mxu0 0
    %275 = vmatprep.subr.bf16.mxu0 0
    %276 = vmatpush1.bf16.msra.mxu0 0
    %277 = vmatprep.subr.bf16.mxu0 0
    %278 = vmatpush1.bf16.msra.mxu0 0
    %279 = vmatprep.subr.bf16.mxu0 0
    %280 = vmatpush1.bf16.msra.mxu0 0
    %281 = vmatprep.subr.bf16.mxu0 0
    %282 = vmatpush1.bf16.msra.mxu0 0
    %283 = vmatprep.subr.bf16.mxu0 0
    %284 = vmatpush1.bf16.msra.mxu0 0
    %285 = vmatprep.subr.bf16.mxu0 0
    %286 = vmatpush1.bf16.msra.mxu0 0
    %287 = vmatprep.subr.bf16.mxu0 0
    %288 = vmatpush1.bf16.msra.mxu0 0
    %289 = vmatprep.subr.bf16.mxu0 0
    %290 = vmatpush1.bf16.msra.mxu0 0
    %291 = vmatprep.subr.bf16.mxu0 0
    %292 = vmatpush1.bf16.msra.mxu0 0
    %293 = vmatprep.subr.bf16.mxu0 0
    %294 = vmatpush1.bf16.msra.mxu0 0
    %295 = vmatprep.subr.bf16.mxu0 0
    %296 = vmatpush1.bf16.msra.mxu0 0
    %297 = vmatprep.mubr.bf16.mxu0 0
    %298 = vmatmul.mubr.bf16.gmra.mrb[0].mxu0 %v254
    %v299 = vpop.f32.mrb[0].mxu0
    %v300 = vadd.f32 %v224, %v299
    %v301 = vpop.f32.mrb[0].mxu0
    %v302 = vpop.f32.mrb[0].mxu0
    %v303 = vadd.f32 %v224, %v302
    %v304 = vpop.f32.mrb[0].mxu0
    %305 = vmatprep.mubr.bf16.mxu0 0
    %306 = vmatmul.mubr.bf16.gmra.mrb[0].mxu0 %v257
    %v307 = vpop.f32.mrb[0].mxu0
    %v308 = vadd.f32 %v224, %v307
    %v309 = vpop.f32.mrb[0].mxu0
    %v310 = vpop.f32.mrb[0].mxu0
    %v311 = vadd.f32 %v224, %v310
    %v312 = vpop.f32.mrb[0].mxu0
    %313 = vmatprep.mubr.bf16.mxu0 0
    %314 = vmatmul.mubr.bf16.gmra.mrb[0].mxu0 %v260
    %v315 = vpop.f32.mrb[0].mxu0
    %v316 = vadd.f32 %v224, %v315
    %v317 = vpop.f32.mrb[0].mxu0
    %v318 = vpop.f32.mrb[0].mxu0
    %v319 = vadd.f32 %v224, %v318
    %v320 = vpop.f32.mrb[0].mxu0
    %321 = vmatprep.mubr.bf16.mxu0 0
    %322 = vmatmul.mubr.bf16.gmra.mrb[0].mxu0 %v263
    %v323 = vpop.f32.mrb[0].mxu0
    %v324 = vadd.f32 %v224, %v323
    %v325 = vpop.f32.mrb[0].mxu0
    %v326 = vpop.f32.mrb[0].mxu0
    %v327 = vadd.f32 %v224, %v326
    %v328 = vpop.f32.mrb[0].mxu0
    %329 = vdwg.mxu0
    %v330 = vmax.f32 %v300, 0.0
    %v331 = vmax.f32 %v303, 0.0
    %v332 = vmax.f32 %v308, 0.0
    %v333 = vmax.f32 %v311, 0.0
    %v334 = vmax.f32 %v316, 0.0
    %v335 = vmax.f32 %v319, 0.0
    %v336 = vmax.f32 %v324, 0.0
    %v337 = vmax.f32 %v327, 0.0
    %v338 = vpack.c.bf16 %v331, %v330
    %v339 = vpack.c.bf16 %v333, %v332
    %v340 = vpack.c.bf16 %v335, %v334
    %v341 = vpack.c.bf16 %v337, %v336
    %v342 = vld [vmem:[%s5] sm:$0xf]
    %v343 = vld [vmem:[%s5 + $0x4] sm:$0xf]
    %v344 = vld [vmem:[%s5 + $0x8] sm:$0xf]
    %v345 = vld [vmem:[%s5 + $0xc] sm:$0xf]
    %v346 = vld [vmem:[%s6] sm:$0x1]
    %v348 = vlaneseq
    %v349 = vshrl.u32 %v348, 7
    %v350 = vsub.s32 0, %v349
    %v351 = vrot.slane %v346, %v350
    %v357 = vunpack.c.l.b16 %v342
    %v358 = vunpack.c.l.b16 %v343
    %v359 = vunpack.c.l.b16 %v344
    %v360 = vunpack.c.l.b16 %v345
    %v361 = vpack.c.b16 %v358, %v357
    %v362 = vpack.c.b16 %v360, %v359
    %vm365 = vcmask 261120
    %v367 = vsel %vm365, %v338, 0
    %v370 = vsel %vm365, %v339, 0
    %v373 = vsel %vm365, %v340, 0
    %v376 = vsel %vm365, %v341, 0
    %378 = vmatprep.subr.bf16.mxu0 0
    %379 = vmatpush1.bf16.msra.mxu0 %v361
    %380 = vmatprep.subr.bf16.mxu0 0
    %381 = vmatpush1.bf16.msra.mxu0 %v362
    %382 = vmatprep.subr.bf16.mxu0 0
    %383 = vmatpush1.bf16.msra.mxu0 0
    %384 = vmatprep.subr.bf16.mxu0 0
    %385 = vmatpush1.bf16.msra.mxu0 0
    %386 = vmatprep.subr.bf16.mxu0 0
    %387 = vmatpush1.bf16.msra.mxu0 0
    %388 = vmatprep.subr.bf16.mxu0 0
    %389 = vmatpush1.bf16.msra.mxu0 0
    %390 = vmatprep.subr.bf16.mxu0 0
    %391 = vmatpush1.bf16.msra.mxu0 0
    %392 = vmatprep.subr.bf16.mxu0 0
    %393 = vmatpush1.bf16.msra.mxu0 0
    %394 = vmatprep.subr.bf16.mxu0 0
    %395 = vmatpush1.bf16.msra.mxu0 0
    %396 = vmatprep.subr.bf16.mxu0 0
    %397 = vmatpush1.bf16.msra.mxu0 0
    %398 = vmatprep.subr.bf16.mxu0 0
    %399 = vmatpush1.bf16.msra.mxu0 0
    %400 = vmatprep.subr.bf16.mxu0 0
    %401 = vmatpush1.bf16.msra.mxu0 0
    %402 = vmatprep.subr.bf16.mxu0 0
    %403 = vmatpush1.bf16.msra.mxu0 0
    %404 = vmatprep.subr.bf16.mxu0 0
    %405 = vmatpush1.bf16.msra.mxu0 0
    %406 = vmatprep.subr.bf16.mxu0 0
    %407 = vmatpush1.bf16.msra.mxu0 0
    %408 = vmatprep.subr.bf16.mxu0 0
    %409 = vmatpush1.bf16.msra.mxu0 0
    %410 = vmatprep.mubr.bf16.mxu0 0
    %411 = vmatmul.mubr.bf16.gmra.mrb[0].mxu0 %v367
    %v412 = vpop.f32.mrb[0].mxu0
    %v413 = vadd.f32 %v351, %v412
    %v414 = vpop.f32.mrb[0].mxu0
    %v415 = vpop.f32.mrb[0].mxu0
    %v416 = vadd.f32 %v351, %v415
    %v417 = vpop.f32.mrb[0].mxu0
    %418 = vmatprep.mubr.bf16.mxu0 0
    %419 = vmatmul.mubr.bf16.gmra.mrb[0].mxu0 %v370
    %v420 = vpop.f32.mrb[0].mxu0
    %v421 = vadd.f32 %v351, %v420
    %v422 = vpop.f32.mrb[0].mxu0
    %v423 = vpop.f32.mrb[0].mxu0
    %v424 = vadd.f32 %v351, %v423
    %v425 = vpop.f32.mrb[0].mxu0
    %426 = vmatprep.mubr.bf16.mxu0 0
    %427 = vmatmul.mubr.bf16.gmra.mrb[0].mxu0 %v373
    %v428 = vpop.f32.mrb[0].mxu0
    %v429 = vadd.f32 %v351, %v428
    %v430 = vpop.f32.mrb[0].mxu0
    %v431 = vpop.f32.mrb[0].mxu0
    %v432 = vadd.f32 %v351, %v431
    %v433 = vpop.f32.mrb[0].mxu0
    %434 = vmatprep.mubr.bf16.mxu0 0
    %435 = vmatmul.mubr.bf16.gmra.mrb[0].mxu0 %v376
    %v436 = vpop.f32.mrb[0].mxu0
    %v437 = vadd.f32 %v351, %v436
    %v438 = vpop.f32.mrb[0].mxu0
    %v439 = vpop.f32.mrb[0].mxu0
    %v440 = vadd.f32 %v351, %v439
    %v441 = vpop.f32.mrb[0].mxu0
    %442 = vdwg.mxu0
    %v443 = vmax.f32 %v413, 0.0
    %v444 = vmax.f32 %v416, 0.0
    %v445 = vmax.f32 %v421, 0.0
    %v446 = vmax.f32 %v424, 0.0
    %v447 = vmax.f32 %v429, 0.0
    %v448 = vmax.f32 %v432, 0.0
    %v449 = vmax.f32 %v437, 0.0
    %v450 = vmax.f32 %v440, 0.0
    %v451 = vpack.c.bf16 %v444, %v443
    %v452 = vpack.c.bf16 %v446, %v445
    %v453 = vpack.c.bf16 %v448, %v447
    %v454 = vpack.c.bf16 %v450, %v449
    %v455 = vld [vmem:[%s7] sm:$0xf]
    %v456 = vld [vmem:[%s7 + $0x4] sm:$0xf]
    %v457 = vld [vmem:[%s8] sm:$0x1]
    %v459 = vlaneseq
    %v460 = vshrl.u32 %v459, 7
    %v461 = vsub.s32 0, %v460
    %v462 = vrot.slane %v457, %v461
    %v466 = vunpack.c.l.b16 %v455
    %v467 = vunpack.c.l.b16 %v456
    %v468 = vpack.c.b16 %v467, %v466
    %v471 = vsel %vm252, %v451, 0
    %v474 = vsel %vm252, %v452, 0
    %v477 = vsel %vm252, %v453, 0
    %v480 = vsel %vm252, %v454, 0
    %482 = vmatprep.subr.bf16.mxu0 0
    %483 = vmatpush1.bf16.msra.mxu0 %v468
    %484 = vmatprep.subr.bf16.mxu0 0
    %485 = vmatpush1.bf16.msra.mxu0 0
    %486 = vmatprep.subr.bf16.mxu0 0
    %487 = vmatpush1.bf16.msra.mxu0 0
    %488 = vmatprep.subr.bf16.mxu0 0
    %489 = vmatpush1.bf16.msra.mxu0 0
    %490 = vmatprep.subr.bf16.mxu0 0
    %491 = vmatpush1.bf16.msra.mxu0 0
    %492 = vmatprep.subr.bf16.mxu0 0
    %493 = vmatpush1.bf16.msra.mxu0 0
    %494 = vmatprep.subr.bf16.mxu0 0
    %495 = vmatpush1.bf16.msra.mxu0 0
    %496 = vmatprep.subr.bf16.mxu0 0
    %497 = vmatpush1.bf16.msra.mxu0 0
    %498 = vmatprep.subr.bf16.mxu0 0
    %499 = vmatpush1.bf16.msra.mxu0 0
    %500 = vmatprep.subr.bf16.mxu0 0
    %501 = vmatpush1.bf16.msra.mxu0 0
    %502 = vmatprep.subr.bf16.mxu0 0
    %503 = vmatpush1.bf16.msra.mxu0 0
    %504 = vmatprep.subr.bf16.mxu0 0
    %505 = vmatpush1.bf16.msra.mxu0 0
    %506 = vmatprep.subr.bf16.mxu0 0
    %507 = vmatpush1.bf16.msra.mxu0 0
    %508 = vmatprep.subr.bf16.mxu0 0
    %509 = vmatpush1.bf16.msra.mxu0 0
    %510 = vmatprep.subr.bf16.mxu0 0
    %511 = vmatpush1.bf16.msra.mxu0 0
    %512 = vmatprep.subr.bf16.mxu0 0
    %513 = vmatpush1.bf16.msra.mxu0 0
    %514 = vmatprep.mubr.bf16.mxu0 0
    %515 = vmatmul.mubr.bf16.gmra.mrb[0].mxu0 %v471
    %v516 = vpop.f32.mrb[0].mxu0
    %v517 = vadd.f32 %v462, %v516
    %v518 = vpop.f32.mrb[0].mxu0
    %v519 = vpop.f32.mrb[0].mxu0
    %v520 = vadd.f32 %v462, %v519
    %v521 = vpop.f32.mrb[0].mxu0
    %522 = vmatprep.mubr.bf16.mxu0 0
    %523 = vmatmul.mubr.bf16.gmra.mrb[0].mxu0 %v474
    %v524 = vpop.f32.mrb[0].mxu0
    %v525 = vadd.f32 %v462, %v524
    %v526 = vpop.f32.mrb[0].mxu0
    %v527 = vpop.f32.mrb[0].mxu0
    %v528 = vadd.f32 %v462, %v527
    %v529 = vpop.f32.mrb[0].mxu0
    %530 = vmatprep.mubr.bf16.mxu0 0
    %531 = vmatmul.mubr.bf16.gmra.mrb[0].mxu0 %v477
    %v532 = vpop.f32.mrb[0].mxu0
    %v533 = vadd.f32 %v462, %v532
    %v534 = vpop.f32.mrb[0].mxu0
    %v535 = vpop.f32.mrb[0].mxu0
    %v536 = vadd.f32 %v462, %v535
    %v537 = vpop.f32.mrb[0].mxu0
    %538 = vmatprep.mubr.bf16.mxu0 0
    %539 = vmatmul.mubr.bf16.gmra.mrb[0].mxu0 %v480
    %v540 = vpop.f32.mrb[0].mxu0
    %v541 = vadd.f32 %v462, %v540
    %v542 = vpop.f32.mrb[0].mxu0
    %v543 = vpop.f32.mrb[0].mxu0
    %v544 = vadd.f32 %v462, %v543
    %v545 = vpop.f32.mrb[0].mxu0
    %546 = vdwg.mxu0
    %v547 = vld [vmem:[%s2] sm:$0xff]
    %v548 = vld [vmem:[%s2 + $0x8] sm:$0xff]
    %v549 = vld [vmem:[%s2 + $0x10] sm:$0xff]
    %v550 = vld [vmem:[%s2 + $0x18] sm:$0xff]
    %v551 = vld [vmem:[%s2 + $0x20] sm:$0xff]
    %v552 = vld [vmem:[%s2 + $0x28] sm:$0xff]
    %v553 = vld [vmem:[%s2 + $0x30] sm:$0xff]
    %v554 = vld [vmem:[%s2 + $0x38] sm:$0xff]
    %556 = vset.pattern.permute.xlu0 0
    %557 = vperm.xlu0 %556, %v547
    %v558 = vpop.permute.xlu0 %557
    %561 = vset.pattern.permute.xlu0 0
    %562 = vperm.xlu0 %561, %v548
    %v563 = vpop.permute.xlu0 %562
    %566 = vset.pattern.permute.xlu0 0
    %567 = vperm.xlu0 %566, %v549
    %v568 = vpop.permute.xlu0 %567
    %571 = vset.pattern.permute.xlu0 0
    %572 = vperm.xlu0 %571, %v550
    %v573 = vpop.permute.xlu0 %572
    %576 = vset.pattern.permute.xlu0 0
    %577 = vperm.xlu0 %576, %v551
    %v578 = vpop.permute.xlu0 %577
    %581 = vset.pattern.permute.xlu0 0
    %582 = vperm.xlu0 %581, %v552
    %v583 = vpop.permute.xlu0 %582
    %586 = vset.pattern.permute.xlu0 0
    %587 = vperm.xlu0 %586, %v553
    %v588 = vpop.permute.xlu0 %587
    %591 = vset.pattern.permute.xlu0 0
    %592 = vperm.xlu0 %591, %v554
    %v593 = vpop.permute.xlu0 %592
    %v595 = vmul.f32 %v517, 0.1
    %v596 = vmul.f32 %v520, 0.1
    %v597 = vmul.f32 %v525, 0.1
    %v598 = vmul.f32 %v528, 0.1
    %v599 = vmul.f32 %v533, 0.1
    %v600 = vmul.f32 %v536, 0.1
    %v601 = vmul.f32 %v541, 0.1
    %v602 = vmul.f32 %v544, 0.1
    %v603 = vmul.f32 %v558, 0.9
    %v604 = vmul.f32 %v563, 0.9
    %v605 = vmul.f32 %v568, 0.9
    %v606 = vmul.f32 %v573, 0.9
    %v607 = vmul.f32 %v578, 0.9
    %v608 = vmul.f32 %v583, 0.9
    %v609 = vmul.f32 %v588, 0.9
    %v610 = vmul.f32 %v593, 0.9
    %v611 = vmul.f32 %v558, %v517
    %v612 = vmul.f32 %v563, %v520
    %v613 = vmul.f32 %v568, %v525
    %v614 = vmul.f32 %v573, %v528
    %v615 = vmul.f32 %v578, %v533
    %v616 = vmul.f32 %v583, %v536
    %v617 = vmul.f32 %v588, %v541
    %v618 = vmul.f32 %v593, %v544
    %v619 = vpack.c.bf16 %v612, %v611
    %v620 = vpack.c.bf16 %v614, %v613
    %v621 = vpack.c.bf16 %v616, %v615
    %v622 = vpack.c.bf16 %v618, %v617
    %s623 = smul.u32 4, 2
    %s624 = smul.u32 %s623, 1
    %s625 = sshll.u32 %s624, 4
    %626 = dma.done [#allocation4], %s625
    %v627 = vld [vmem:[#allocation2] sm:$0xff]
    %vm628 = vcmask 523264
    %v630 = vsel %vm628, %v627, 0
    %632 = vmatprep.subr.bf16.mxu0 0
    %633 = vmatpush1.bf16.msra.mxu0 %v619
    %634 = vmatprep.subr.bf16.mxu0 0
    %635 = vmatpush1.bf16.msra.mxu0 %v620
    %636 = vmatprep.subr.bf16.mxu0 0
    %637 = vmatpush1.bf16.msra.mxu0 %v621
    %638 = vmatprep.subr.bf16.mxu0 0
    %639 = vmatpush1.bf16.msra.mxu0 %v622
    %640 = vmatprep.subr.bf16.mxu0 0
    %641 = vmatpush1.bf16.msra.mxu0 0
    %642 = vmatprep.subr.bf16.mxu0 0
    %643 = vmatpush1.bf16.msra.mxu0 0
    %644 = vmatprep.subr.bf16.mxu0 0
    %645 = vmatpush1.bf16.msra.mxu0 0
    %646 = vmatprep.subr.bf16.mxu0 0
    %647 = vmatpush1.bf16.msra.mxu0 0
    %648 = vmatprep.subr.bf16.mxu0 0
    %649 = vmatpush1.bf16.msra.mxu0 0
    %650 = vmatprep.subr.bf16.mxu0 0
    %651 = vmatpush1.bf16.msra.mxu0 0
    %652 = vmatprep.subr.bf16.mxu0 0
    %653 = vmatpush1.bf16.msra.mxu0 0
    %654 = vmatprep.subr.bf16.mxu0 0
    %655 = vmatpush1.bf16.msra.mxu0 0
    %656 = vmatprep.subr.bf16.mxu0 0
    %657 = vmatpush1.bf16.msra.mxu0 0
    %658 = vmatprep.subr.bf16.mxu0 0
    %659 = vmatpush1.bf16.msra.mxu0 0
    %660 = vmatprep.subr.bf16.mxu0 0
    %661 = vmatpush1.bf16.msra.mxu0 0
    %662 = vmatprep.subr.bf16.mxu0 0
    %663 = vmatpush1.bf16.msra.mxu0 0
    %664 = vmatprep.mubr.bf16.mxu0 0
    %665 = vmatmul.mubr.bf16.gmra.mrb[0].mxu0 %v630
    %v666 = vpop.f32.mrb[0].mxu0
    %v667 = vadd.f32 0.0, %v666
    %v668 = vpop.f32.mrb[0].mxu0
    %v669 = vpop.f32.mrb[0].mxu0
    %v670 = vadd.f32 0.0, %v669
    %v671 = vpop.f32.mrb[0].mxu0
    %672 = vdwg.mxu0
    %v673 = vmul.f32 %v603, %v667
    %v674 = vmul.f32 %v604, %v670
    %v675 = vadd.f32 %v673, %v595
    %v676 = vadd.f32 %v674, %v596
    %677 = vst [vmem:[#allocation3] sm:$0xff] %v675
    %678 = vst [vmem:[#allocation3 + $0x8] sm:$0xff] %v676
    %s679 = sshll.u32 %s624, 4
    %680 = dma.done %s76, %s679
    %v681 = vld [vmem:[#allocation2 + $0x8] sm:$0xff]
    %v683 = vsel %vm628, %v681, 0
    %685 = vmatprep.subr.bf16.mxu0 0
    %686 = vmatpush1.bf16.msra.mxu0 %v619
    %687 = vmatprep.subr.bf16.mxu0 0
    %688 = vmatpush1.bf16.msra.mxu0 %v620
    %689 = vmatprep.subr.bf16.mxu0 0
    %690 = vmatpush1.bf16.msra.mxu0 %v621
    %691 = vmatprep.subr.bf16.mxu0 0
    %692 = vmatpush1.bf16.msra.mxu0 %v622
    %693 = vmatprep.subr.bf16.mxu0 0
    %694 = vmatpush1.bf16.msra.mxu0 0
    %695 = vmatprep.subr.bf16.mxu0 0
    %696 = vmatpush1.bf16.msra.mxu0 0
    %697 = vmatprep.subr.bf16.mxu0 0
    %698 = vmatpush1.bf16.msra.mxu0 0
    %699 = vmatprep.subr.bf16.mxu0 0
    %700 = vmatpush1.bf16.msra.mxu0 0
    %701 = vmatprep.subr.bf16.mxu0 0
    %702 = vmatpush1.bf16.msra.mxu0 0
    %703 = vmatprep.subr.bf16.mxu0 0
    %704 = vmatpush1.bf16.msra.mxu0 0
    %705 = vmatprep.subr.bf16.mxu0 0
    %706 = vmatpush1.bf16.msra.mxu0 0
    %707 = vmatprep.subr.bf16.mxu0 0
    %708 = vmatpush1.bf16.msra.mxu0 0
    %709 = vmatprep.subr.bf16.mxu0 0
    %710 = vmatpush1.bf16.msra.mxu0 0
    %711 = vmatprep.subr.bf16.mxu0 0
    %712 = vmatpush1.bf16.msra.mxu0 0
    %713 = vmatprep.subr.bf16.mxu0 0
    %714 = vmatpush1.bf16.msra.mxu0 0
    %715 = vmatprep.subr.bf16.mxu0 0
    %716 = vmatpush1.bf16.msra.mxu0 0
    %717 = vmatprep.mubr.bf16.mxu0 0
    %718 = vmatmul.mubr.bf16.gmra.mrb[0].mxu0 %v683
    %v719 = vpop.f32.mrb[0].mxu0
    %v720 = vadd.f32 0.0, %v719
    %v721 = vpop.f32.mrb[0].mxu0
    %v722 = vpop.f32.mrb[0].mxu0
    %v723 = vadd.f32 0.0, %v722
    %v724 = vpop.f32.mrb[0].mxu0
    %725 = vdwg.mxu0
    %v726 = vmul.f32 %v605, %v720
    %v727 = vmul.f32 %v606, %v723
    %v728 = vadd.f32 %v726, %v597
    %v729 = vadd.f32 %v727, %v598
    %730 = vst [vmem:[#allocation3 + $0x10] sm:$0xff] %v728
    %731 = vst [vmem:[#allocation3 + $0x18] sm:$0xff] %v729
    %s732 = sshll.u32 %s624, 4
    %733 = dma.done %s121, %s732
    %v734 = vld [vmem:[#allocation2 + $0x10] sm:$0xff]
    %v736 = vsel %vm628, %v734, 0
    %738 = vmatprep.subr.bf16.mxu0 0
    %739 = vmatpush1.bf16.msra.mxu0 %v619
    %740 = vmatprep.subr.bf16.mxu0 0
    %741 = vmatpush1.bf16.msra.mxu0 %v620
    %742 = vmatprep.subr.bf16.mxu0 0
    %743 = vmatpush1.bf16.msra.mxu0 %v621
    %744 = vmatprep.subr.bf16.mxu0 0
    %745 = vmatpush1.bf16.msra.mxu0 %v622
    %746 = vmatprep.subr.bf16.mxu0 0
    %747 = vmatpush1.bf16.msra.mxu0 0
    %748 = vmatprep.subr.bf16.mxu0 0
    %749 = vmatpush1.bf16.msra.mxu0 0
    %750 = vmatprep.subr.bf16.mxu0 0
    %751 = vmatpush1.bf16.msra.mxu0 0
    %752 = vmatprep.subr.bf16.mxu0 0
    %753 = vmatpush1.bf16.msra.mxu0 0
    %754 = vmatprep.subr.bf16.mxu0 0
    %755 = vmatpush1.bf16.msra.mxu0 0
    %756 = vmatprep.subr.bf16.mxu0 0
    %757 = vmatpush1.bf16.msra.mxu0 0
    %758 = vmatprep.subr.bf16.mxu0 0
    %759 = vmatpush1.bf16.msra.mxu0 0
    %760 = vmatprep.subr.bf16.mxu0 0
    %761 = vmatpush1.bf16.msra.mxu0 0
    %762 = vmatprep.subr.bf16.mxu0 0
    %763 = vmatpush1.bf16.msra.mxu0 0
    %764 = vmatprep.subr.bf16.mxu0 0
    %765 = vmatpush1.bf16.msra.mxu0 0
    %766 = vmatprep.subr.bf16.mxu0 0
    %767 = vmatpush1.bf16.msra.mxu0 0
    %768 = vmatprep.subr.bf16.mxu0 0
    %769 = vmatpush1.bf16.msra.mxu0 0
    %770 = vmatprep.mubr.bf16.mxu0 0
    %771 = vmatmul.mubr.bf16.gmra.mrb[0].mxu0 %v736
    %v772 = vpop.f32.mrb[0].mxu0
    %v773 = vadd.f32 0.0, %v772
    %v774 = vpop.f32.mrb[0].mxu0
    %v775 = vpop.f32.mrb[0].mxu0
    %v776 = vadd.f32 0.0, %v775
    %v777 = vpop.f32.mrb[0].mxu0
    %778 = vdwg.mxu0
    %v779 = vmul.f32 %v607, %v773
    %v780 = vmul.f32 %v608, %v776
    %v781 = vadd.f32 %v779, %v599
    %v782 = vadd.f32 %v780, %v600
    %783 = vst [vmem:[#allocation3 + $0x20] sm:$0xff] %v781
    %784 = vst [vmem:[#allocation3 + $0x28] sm:$0xff] %v782
    %s785 = sshll.u32 %s624, 4
    %786 = dma.done %s166, %s785
    %v787 = vld [vmem:[#allocation2 + $0x18] sm:$0xff]
    %v789 = vsel %vm628, %v787, 0
    %791 = vmatprep.subr.bf16.mxu0 0
    %792 = vmatpush1.bf16.msra.mxu0 %v619
    %793 = vmatprep.subr.bf16.mxu0 0
    %794 = vmatpush1.bf16.msra.mxu0 %v620
    %795 = vmatprep.subr.bf16.mxu0 0
    %796 = vmatpush1.bf16.msra.mxu0 %v621
    %797 = vmatprep.subr.bf16.mxu0 0
    %798 = vmatpush1.bf16.msra.mxu0 %v622
    %799 = vmatprep.subr.bf16.mxu0 0
    %800 = vmatpush1.bf16.msra.mxu0 0
    %801 = vmatprep.subr.bf16.mxu0 0
    %802 = vmatpush1.bf16.msra.mxu0 0
    %803 = vmatprep.subr.bf16.mxu0 0
    %804 = vmatpush1.bf16.msra.mxu0 0
    %805 = vmatprep.subr.bf16.mxu0 0
    %806 = vmatpush1.bf16.msra.mxu0 0
    %807 = vmatprep.subr.bf16.mxu0 0
    %808 = vmatpush1.bf16.msra.mxu0 0
    %809 = vmatprep.subr.bf16.mxu0 0
    %810 = vmatpush1.bf16.msra.mxu0 0
    %811 = vmatprep.subr.bf16.mxu0 0
    %812 = vmatpush1.bf16.msra.mxu0 0
    %813 = vmatprep.subr.bf16.mxu0 0
    %814 = vmatpush1.bf16.msra.mxu0 0
    %815 = vmatprep.subr.bf16.mxu0 0
    %816 = vmatpush1.bf16.msra.mxu0 0
    %817 = vmatprep.subr.bf16.mxu0 0
    %818 = vmatpush1.bf16.msra.mxu0 0
    %819 = vmatprep.subr.bf16.mxu0 0
    %820 = vmatpush1.bf16.msra.mxu0 0
    %821 = vmatprep.subr.bf16.mxu0 0
    %822 = vmatpush1.bf16.msra.mxu0 0
    %823 = vmatprep.mubr.bf16.mxu0 0
    %824 = vmatmul.mubr.bf16.gmra.mrb[0].mxu0 %v789
    %v825 = vpop.f32.mrb[0].mxu0
    %v826 = vadd.f32 0.0, %v825
    %v827 = vpop.f32.mrb[0].mxu0
    %v828 = vpop.f32.mrb[0].mxu0
    %v829 = vadd.f32 0.0, %v828
    %v830 = vpop.f32.mrb[0].mxu0
    %831 = vdwg.mxu0
    %v832 = vmul.f32 %v609, %v826
    %v833 = vmul.f32 %v610, %v829
    %v834 = vadd.f32 %v832, %v601
    %v835 = vadd.f32 %v833, %v602
    %836 = vst [vmem:[#allocation3 + $0x30] sm:$0xff] %v834
    %837 = vst [vmem:[#allocation3 + $0x38] sm:$0xff] %v835
    %v838 = vld [vmem:[#allocation3] sm:$0xff]
    %v839 = vld [vmem:[#allocation3 + $0x8] sm:$0xff]
    %v840 = vld [vmem:[#allocation3 + $0x10] sm:$0xff]
    %v841 = vld [vmem:[#allocation3 + $0x18] sm:$0xff]
    %v842 = vld [vmem:[#allocation3 + $0x20] sm:$0xff]
    %v843 = vld [vmem:[#allocation3 + $0x28] sm:$0xff]
    %v844 = vld [vmem:[#allocation3 + $0x30] sm:$0xff]
    %v845 = vld [vmem:[#allocation3 + $0x38] sm:$0xff]
    %v846 = vld [vmem:[#allocation2] sm:$0xff]
    %v847 = vld [vmem:[#allocation2 + $0x8] sm:$0xff]
    %v848 = vld [vmem:[#allocation2 + $0x10] sm:$0xff]
    %v849 = vld [vmem:[#allocation2 + $0x18] sm:$0xff]
    %v850 = vmul.f32 %v558, %v838
    %v851 = vmul.f32 %v563, %v839
    %v852 = vmul.f32 %v568, %v840
    %v853 = vmul.f32 %v573, %v841
    %v854 = vmul.f32 %v578, %v842
    %v855 = vmul.f32 %v583, %v843
    %v856 = vmul.f32 %v588, %v844
    %v857 = vmul.f32 %v593, %v845
    %v858 = vpack.c.bf16 %v851, %v850
    %v859 = vpack.c.bf16 %v853, %v852
    %v860 = vpack.c.bf16 %v855, %v854
    %v861 = vpack.c.bf16 %v857, %v856
    %v863 = vsel %vm628, %v846, 0
    %v866 = vsel %vm628, %v847, 0
    %v869 = vsel %vm628, %v848, 0
    %v872 = vsel %vm628, %v849, 0
    %874 = vmatprep.subr.bf16.mxu0 0
    %875 = vmatpush1.bf16.msra.mxu0 %v858
    %876 = vmatprep.subr.bf16.mxu0 0
    %877 = vmatpush1.bf16.msra.mxu0 %v859
    %878 = vmatprep.subr.bf16.mxu0 0
    %879 = vmatpush1.bf16.msra.mxu0 %v860
    %880 = vmatprep.subr.bf16.mxu0 0
    %881 = vmatpush1.bf16.msra.mxu0 %v861
    %882 = vmatprep.subr.bf16.mxu0 0
    %883 = vmatpush1.bf16.msra.mxu0 0
    %884 = vmatprep.subr.bf16.mxu0 0
    %885 = vmatpush1.bf16.msra.mxu0 0
    %886 = vmatprep.subr.bf16.mxu0 0
    %887 = vmatpush1.bf16.msra.mxu0 0
    %888 = vmatprep.subr.bf16.mxu0 0
    %889 = vmatpush1.bf16.msra.mxu0 0
    %890 = vmatprep.subr.bf16.mxu0 0
    %891 = vmatpush1.bf16.msra.mxu0 0
    %892 = vmatprep.subr.bf16.mxu0 0
    %893 = vmatpush1.bf16.msra.mxu0 0
    %894 = vmatprep.subr.bf16.mxu0 0
    %895 = vmatpush1.bf16.msra.mxu0 0
    %896 = vmatprep.subr.bf16.mxu0 0
    %897 = vmatpush1.bf16.msra.mxu0 0
    %898 = vmatprep.subr.bf16.mxu0 0
    %899 = vmatpush1.bf16.msra.mxu0 0
    %900 = vmatprep.subr.bf16.mxu0 0
    %901 = vmatpush1.bf16.msra.mxu0 0
    %902 = vmatprep.subr.bf16.mxu0 0
    %903 = vmatpush1.bf16.msra.mxu0 0
    %904 = vmatprep.subr.bf16.mxu0 0
    %905 = vmatpush1.bf16.msra.mxu0 0
    %906 = vmatprep.mubr.bf16.mxu0 0
    %907 = vmatmul.mubr.bf16.gmra.mrb[0].mxu0 %v863
    %v908 = vpop.f32.mrb[0].mxu0
    %v909 = vadd.f32 0.0, %v908
    %v910 = vpop.f32.mrb[0].mxu0
    %v911 = vpop.f32.mrb[0].mxu0
    %v912 = vadd.f32 0.0, %v911
    %v913 = vpop.f32.mrb[0].mxu0
    %914 = vmatprep.mubr.bf16.mxu0 0
    %915 = vmatmul.mubr.bf16.gmra.mrb[0].mxu0 %v866
    %v916 = vpop.f32.mrb[0].mxu0
    %v917 = vadd.f32 0.0, %v916
    %v918 = vpop.f32.mrb[0].mxu0
    %v919 = vpop.f32.mrb[0].mxu0
    %v920 = vadd.f32 0.0, %v919
    %v921 = vpop.f32.mrb[0].mxu0
    %922 = vmatprep.mubr.bf16.mxu0 0
    %923 = vmatmul.mubr.bf16.gmra.mrb[0].mxu0 %v869
    %v924 = vpop.f32.mrb[0].mxu0
    %v925 = vadd.f32 0.0, %v924
    %v926 = vpop.f32.mrb[0].mxu0
    %v927 = vpop.f32.mrb[0].mxu0
    %v928 = vadd.f32 0.0, %v927
    %v929 = vpop.f32.mrb[0].mxu0
    %930 = vmatprep.mubr.bf16.mxu0 0
    %931 = vmatmul.mubr.bf16.gmra.mrb[0].mxu0 %v872
    %v932 = vpop.f32.mrb[0].mxu0
    %v933 = vadd.f32 0.0, %v932
    %v934 = vpop.f32.mrb[0].mxu0
    %v935 = vpop.f32.mrb[0].mxu0
    %v936 = vadd.f32 0.0, %v935
    %v937 = vpop.f32.mrb[0].mxu0
    %938 = vdwg.mxu0
    %v939 = vmul.f32 %v603, %v909
    %v940 = vmul.f32 %v604, %v912
    %v941 = vmul.f32 %v605, %v917
    %v942 = vmul.f32 %v606, %v920
    %v943 = vmul.f32 %v607, %v925
    %v944 = vmul.f32 %v608, %v928
    %v945 = vmul.f32 %v609, %v933
    %v946 = vmul.f32 %v610, %v936
    %v947 = vadd.f32 %v939, %v595
    %v948 = vadd.f32 %v940, %v596
    %v949 = vadd.f32 %v941, %v597
    %v950 = vadd.f32 %v942, %v598
    %v951 = vadd.f32 %v943, %v599
    %v952 = vadd.f32 %v944, %v600
    %v953 = vadd.f32 %v945, %v601
    %v954 = vadd.f32 %v946, %v602
    %v955 = vmul.f32 %v558, %v947
    %v956 = vmul.f32 %v563, %v948
    %v957 = vmul.f32 %v568, %v949
    %v958 = vmul.f32 %v573, %v950
    %v959 = vmul.f32 %v578, %v951
    %v960 = vmul.f32 %v583, %v952
    %v961 = vmul.f32 %v588, %v953
    %v962 = vmul.f32 %v593, %v954
    %v963 = vpack.c.bf16 %v956, %v955
    %v964 = vpack.c.bf16 %v958, %v957
    %v965 = vpack.c.bf16 %v960, %v959
    %v966 = vpack.c.bf16 %v962, %v961
    %967 = vmatprep.subr.bf16.mxu0 0
    %968 = vmatpush1.bf16.msra.mxu0 %v963
    %969 = vmatprep.subr.bf16.mxu0 0
    %970 = vmatpush1.bf16.msra.mxu0 %v964
    %971 = vmatprep.subr.bf16.mxu0 0
    %972 = vmatpush1.bf16.msra.mxu0 %v965
    %973 = vmatprep.subr.bf16.mxu0 0
    %974 = vmatpush1.bf16.msra.mxu0 %v966
    %975 = vmatprep.subr.bf16.mxu0 0
    %976 = vmatpush1.bf16.msra.mxu0 0
    %977 = vmatprep.subr.bf16.mxu0 0
    %978 = vmatpush1.bf16.msra.mxu0 0
    %979 = vmatprep.subr.bf16.mxu0 0
    %980 = vmatpush1.bf16.msra.mxu0 0
    %981 = vmatprep.subr.bf16.mxu0 0
    %982 = vmatpush1.bf16.msra.mxu0 0
    %983 = vmatprep.subr.bf16.mxu0 0
    %984 = vmatpush1.bf16.msra.mxu0 0
    %985 = vmatprep.subr.bf16.mxu0 0
    %986 = vmatpush1.bf16.msra.mxu0 0
    %987 = vmatprep.subr.bf16.mxu0 0
    %988 = vmatpush1.bf16.msra.mxu0 0
    %989 = vmatprep.subr.bf16.mxu0 0
    %990 = vmatpush1.bf16.msra.mxu0 0
    %991 = vmatprep.subr.bf16.mxu0 0
    %992 = vmatpush1.bf16.msra.mxu0 0
    %993 = vmatprep.subr.bf16.mxu0 0
    %994 = vmatpush1.bf16.msra.mxu0 0
    %995 = vmatprep.subr.bf16.mxu0 0
    %996 = vmatpush1.bf16.msra.mxu0 0
    %997 = vmatprep.subr.bf16.mxu0 0
    %998 = vmatpush1.bf16.msra.mxu0 0
    %999 = vmatprep.mubr.bf16.mxu0 0
    %1000 = vmatmul.mubr.bf16.gmra.mrb[0].mxu0 %v863
    %v1001 = vpop.f32.mrb[0].mxu0
    %v1002 = vadd.f32 0.0, %v1001
    %v1003 = vpop.f32.mrb[0].mxu0
    %v1004 = vpop.f32.mrb[0].mxu0
    %v1005 = vadd.f32 0.0, %v1004
    %v1006 = vpop.f32.mrb[0].mxu0
    %1007 = vmatprep.mubr.bf16.mxu0 0
    %1008 = vmatmul.mubr.bf16.gmra.mrb[0].mxu0 %v866
    %v1009 = vpop.f32.mrb[0].mxu0
    %v1010 = vadd.f32 0.0, %v1009
    %v1011 = vpop.f32.mrb[0].mxu0
    %v1012 = vpop.f32.mrb[0].mxu0
    %v1013 = vadd.f32 0.0, %v1012
    %v1014 = vpop.f32.mrb[0].mxu0
    %1015 = vmatprep.mubr.bf16.mxu0 0
    %1016 = vmatmul.mubr.bf16.gmra.mrb[0].mxu0 %v869
    %v1017 = vpop.f32.mrb[0].mxu0
    %v1018 = vadd.f32 0.0, %v1017
    %v1019 = vpop.f32.mrb[0].mxu0
    %v1020 = vpop.f32.mrb[0].mxu0
    %v1021 = vadd.f32 0.0, %v1020
    %v1022 = vpop.f32.mrb[0].mxu0
    %1023 = vmatprep.mubr.bf16.mxu0 0
    %1024 = vmatmul.mubr.bf16.gmra.mrb[0].mxu0 %v872
    %v1025 = vpop.f32.mrb[0].mxu0
    %v1026 = vadd.f32 0.0, %v1025
    %v1027 = vpop.f32.mrb[0].mxu0
    %v1028 = vpop.f32.mrb[0].mxu0
    %v1029 = vadd.f32 0.0, %v1028
    %v1030 = vpop.f32.mrb[0].mxu0
    %1031 = vdwg.mxu0
    %v1032 = vmul.f32 %v603, %v1002
    %v1033 = vmul.f32 %v604, %v1005
    %v1034 = vmul.f32 %v605, %v1010
    %v1035 = vmul.f32 %v606, %v1013
    %v1036 = vmul.f32 %v607, %v1018
    %v1037 = vmul.f32 %v608, %v1021
    %v1038 = vmul.f32 %v609, %v1026
    %v1039 = vmul.f32 %v610, %v1029
    %v1040 = vadd.f32 %v1032, %v595
    %v1041 = vadd.f32 %v1033, %v596
    %v1042 = vadd.f32 %v1034, %v597
    %v1043 = vadd.f32 %v1035, %v598
    %v1044 = vadd.f32 %v1036, %v599
    %v1045 = vadd.f32 %v1037, %v600
    %v1046 = vadd.f32 %v1038, %v601
    %v1047 = vadd.f32 %v1039, %v602
    %v1048 = vmul.f32 %v558, %v1040
    %v1049 = vmul.f32 %v563, %v1041
    %v1050 = vmul.f32 %v568, %v1042
    %v1051 = vmul.f32 %v573, %v1043
    %v1052 = vmul.f32 %v578, %v1044
    %v1053 = vmul.f32 %v583, %v1045
    %v1054 = vmul.f32 %v588, %v1046
    %v1055 = vmul.f32 %v593, %v1047
    %v1056 = vpack.c.bf16 %v1049, %v1048
    %v1057 = vpack.c.bf16 %v1051, %v1050
    %v1058 = vpack.c.bf16 %v1053, %v1052
    %v1059 = vpack.c.bf16 %v1055, %v1054
    %1060 = vmatprep.subr.bf16.mxu0 0
    %1061 = vmatpush1.bf16.msra.mxu0 %v1056
    %1062 = vmatprep.subr.bf16.mxu0 0
    %1063 = vmatpush1.bf16.msra.mxu0 %v1057
    %1064 = vmatprep.subr.bf16.mxu0 0
    %1065 = vmatpush1.bf16.msra.mxu0 %v1058
    %1066 = vmatprep.subr.bf16.mxu0 0
    %1067 = vmatpush1.bf16.msra.mxu0 %v1059
    %1068 = vmatprep.subr.bf16.mxu0 0
    %1069 = vmatpush1.bf16.msra.mxu0 0
    %1070 = vmatprep.subr.bf16.mxu0 0
    %1071 = vmatpush1.bf16.msra.mxu0 0
    %1072 = vmatprep.subr.bf16.mxu0 0
    %1073 = vmatpush1.bf16.msra.mxu0 0
    %1074 = vmatprep.subr.bf16.mxu0 0
    %1075 = vmatpush1.bf16.msra.mxu0 0
    %1076 = vmatprep.subr.bf16.mxu0 0
    %1077 = vmatpush1.bf16.msra.mxu0 0
    %1078 = vmatprep.subr.bf16.mxu0 0
    %1079 = vmatpush1.bf16.msra.mxu0 0
    %1080 = vmatprep.subr.bf16.mxu0 0
    %1081 = vmatpush1.bf16.msra.mxu0 0
    %1082 = vmatprep.subr.bf16.mxu0 0
    %1083 = vmatpush1.bf16.msra.mxu0 0
    %1084 = vmatprep.subr.bf16.mxu0 0
    %1085 = vmatpush1.bf16.msra.mxu0 0
    %1086 = vmatprep.subr.bf16.mxu0 0
    %1087 = vmatpush1.bf16.msra.mxu0 0
    %1088 = vmatprep.subr.bf16.mxu0 0
    %1089 = vmatpush1.bf16.msra.mxu0 0
    %1090 = vmatprep.subr.bf16.mxu0 0
    %1091 = vmatpush1.bf16.msra.mxu0 0
    %1092 = vmatprep.mubr.bf16.mxu0 0
    %1093 = vmatmul.mubr.bf16.gmra.mrb[0].mxu0 %v863
    %v1094 = vpop.f32.mrb[0].mxu0
    %v1095 = vadd.f32 0.0, %v1094
    %v1096 = vpop.f32.mrb[0].mxu0
    %v1097 = vpop.f32.mrb[0].mxu0
    %v1098 = vadd.f32 0.0, %v1097
    %v1099 = vpop.f32.mrb[0].mxu0
    %1100 = vmatprep.mubr.bf16.mxu0 0
    %1101 = vmatmul.mubr.bf16.gmra.mrb[0].mxu0 %v866
    %v1102 = vpop.f32.mrb[0].mxu0
    %v1103 = vadd.f32 0.0, %v1102
    %v1104 = vpop.f32.mrb[0].mxu0
    %v1105 = vpop.f32.mrb[0].mxu0
    %v1106 = vadd.f32 0.0, %v1105
    %v1107 = vpop.f32.mrb[0].mxu0
    %1108 = vmatprep.mubr.bf16.mxu0 0
    %1109 = vmatmul.mubr.bf16.gmra.mrb[0].mxu0 %v869
    %v1110 = vpop.f32.mrb[0].mxu0
    %v1111 = vadd.f32 0.0, %v1110
    %v1112 = vpop.f32.mrb[0].mxu0
    %v1113 = vpop.f32.mrb[0].mxu0
    %v1114 = vadd.f32 0.0, %v1113
    %v1115 = vpop.f32.mrb[0].mxu0
    %1116 = vmatprep.mubr.bf16.mxu0 0
    %1117 = vmatmul.mubr.bf16.gmra.mrb[0].mxu0 %v872
    %v1118 = vpop.f32.mrb[0].mxu0
    %v1119 = vadd.f32 0.0, %v1118
    %v1120 = vpop.f32.mrb[0].mxu0
    %v1121 = vpop.f32.mrb[0].mxu0
    %v1122 = vadd.f32 0.0, %v1121
    %v1123 = vpop.f32.mrb[0].mxu0
    %1124 = vdwg.mxu0
    %v1125 = vmul.f32 %v603, %v1095
    %v1126 = vmul.f32 %v604, %v1098
    %v1127 = vmul.f32 %v605, %v1103
    %v1128 = vmul.f32 %v606, %v1106
    %v1129 = vmul.f32 %v607, %v1111
    %v1130 = vmul.f32 %v608, %v1114
    %v1131 = vmul.f32 %v609, %v1119
    %v1132 = vmul.f32 %v610, %v1122
    %v1133 = vadd.f32 %v1125, %v595
    %v1134 = vadd.f32 %v1126, %v596
    %v1135 = vadd.f32 %v1127, %v597
    %v1136 = vadd.f32 %v1128, %v598
    %v1137 = vadd.f32 %v1129, %v599
    %v1138 = vadd.f32 %v1130, %v600
    %v1139 = vadd.f32 %v1131, %v601
    %v1140 = vadd.f32 %v1132, %v602
    %v1141 = vmul.f32 %v558, %v1133
    %v1142 = vmul.f32 %v563, %v1134
    %v1143 = vmul.f32 %v568, %v1135
    %v1144 = vmul.f32 %v573, %v1136
    %v1145 = vmul.f32 %v578, %v1137
    %v1146 = vmul.f32 %v583, %v1138
    %v1147 = vmul.f32 %v588, %v1139
    %v1148 = vmul.f32 %v593, %v1140
    %v1149 = vpack.c.bf16 %v1142, %v1141
    %v1150 = vpack.c.bf16 %v1144, %v1143
    %v1151 = vpack.c.bf16 %v1146, %v1145
    %v1152 = vpack.c.bf16 %v1148, %v1147
    %1153 = vmatprep.subr.bf16.mxu0 0
    %1154 = vmatpush1.bf16.msra.mxu0 %v1149
    %1155 = vmatprep.subr.bf16.mxu0 0
    %1156 = vmatpush1.bf16.msra.mxu0 %v1150
    %1157 = vmatprep.subr.bf16.mxu0 0
    %1158 = vmatpush1.bf16.msra.mxu0 %v1151
    %1159 = vmatprep.subr.bf16.mxu0 0
    %1160 = vmatpush1.bf16.msra.mxu0 %v1152
    %1161 = vmatprep.subr.bf16.mxu0 0
    %1162 = vmatpush1.bf16.msra.mxu0 0
    %1163 = vmatprep.subr.bf16.mxu0 0
    %1164 = vmatpush1.bf16.msra.mxu0 0
    %1165 = vmatprep.subr.bf16.mxu0 0
    %1166 = vmatpush1.bf16.msra.mxu0 0
    %1167 = vmatprep.subr.bf16.mxu0 0
    %1168 = vmatpush1.bf16.msra.mxu0 0
    %1169 = vmatprep.subr.bf16.mxu0 0
    %1170 = vmatpush1.bf16.msra.mxu0 0
    %1171 = vmatprep.subr.bf16.mxu0 0
    %1172 = vmatpush1.bf16.msra.mxu0 0
    %1173 = vmatprep.subr.bf16.mxu0 0
    %1174 = vmatpush1.bf16.msra.mxu0 0
    %1175 = vmatprep.subr.bf16.mxu0 0
    %1176 = vmatpush1.bf16.msra.mxu0 0
    %1177 = vmatprep.subr.bf16.mxu0 0
    %1178 = vmatpush1.bf16.msra.mxu0 0
    %1179 = vmatprep.subr.bf16.mxu0 0
    %1180 = vmatpush1.bf16.msra.mxu0 0
    %1181 = vmatprep.subr.bf16.mxu0 0
    %1182 = vmatpush1.bf16.msra.mxu0 0
    %1183 = vmatprep.subr.bf16.mxu0 0
    %1184 = vmatpush1.bf16.msra.mxu0 0
    %1185 = vmatprep.mubr.bf16.mxu0 0
    %1186 = vmatmul.mubr.bf16.gmra.mrb[0].mxu0 %v863
    %v1187 = vpop.f32.mrb[0].mxu0
    %v1188 = vadd.f32 0.0, %v1187
    %v1189 = vpop.f32.mrb[0].mxu0
    %v1190 = vpop.f32.mrb[0].mxu0
    %v1191 = vadd.f32 0.0, %v1190
    %v1192 = vpop.f32.mrb[0].mxu0
    %1193 = vmatprep.mubr.bf16.mxu0 0
    %1194 = vmatmul.mubr.bf16.gmra.mrb[0].mxu0 %v866
    %v1195 = vpop.f32.mrb[0].mxu0
    %v1196 = vadd.f32 0.0, %v1195
    %v1197 = vpop.f32.mrb[0].mxu0
    %v1198 = vpop.f32.mrb[0].mxu0
    %v1199 = vadd.f32 0.0, %v1198
    %v1200 = vpop.f32.mrb[0].mxu0
    %1201 = vmatprep.mubr.bf16.mxu0 0
    %1202 = vmatmul.mubr.bf16.gmra.mrb[0].mxu0 %v869
    %v1203 = vpop.f32.mrb[0].mxu0
    %v1204 = vadd.f32 0.0, %v1203
    %v1205 = vpop.f32.mrb[0].mxu0
    %v1206 = vpop.f32.mrb[0].mxu0
    %v1207 = vadd.f32 0.0, %v1206
    %v1208 = vpop.f32.mrb[0].mxu0
    %1209 = vmatprep.mubr.bf16.mxu0 0
    %1210 = vmatmul.mubr.bf16.gmra.mrb[0].mxu0 %v872
    %v1211 = vpop.f32.mrb[0].mxu0
    %v1212 = vadd.f32 0.0, %v1211
    %v1213 = vpop.f32.mrb[0].mxu0
    %v1214 = vpop.f32.mrb[0].mxu0
    %v1215 = vadd.f32 0.0, %v1214
    %v1216 = vpop.f32.mrb[0].mxu0
    %1217 = vdwg.mxu0
    %v1218 = vmul.f32 %v603, %v1188
    %v1219 = vmul.f32 %v604, %v1191
    %v1220 = vmul.f32 %v605, %v1196
    %v1221 = vmul.f32 %v606, %v1199
    %v1222 = vmul.f32 %v607, %v1204
    %v1223 = vmul.f32 %v608, %v1207
    %v1224 = vmul.f32 %v609, %v1212
    %v1225 = vmul.f32 %v610, %v1215
    %v1226 = vadd.f32 %v1218, %v595
    %v1227 = vadd.f32 %v1219, %v596
    %v1228 = vadd.f32 %v1220, %v597
    %v1229 = vadd.f32 %v1221, %v598
    %v1230 = vadd.f32 %v1222, %v599
    %v1231 = vadd.f32 %v1223, %v600
    %v1232 = vadd.f32 %v1224, %v601
    %v1233 = vadd.f32 %v1225, %v602
    %v1234 = vmul.f32 %v558, %v1226
    %v1235 = vmul.f32 %v563, %v1227
    %v1236 = vmul.f32 %v568, %v1228
    %v1237 = vmul.f32 %v573, %v1229
    %v1238 = vmul.f32 %v578, %v1230
    %v1239 = vmul.f32 %v583, %v1231
    %v1240 = vmul.f32 %v588, %v1232
    %v1241 = vmul.f32 %v593, %v1233
    %v1242 = vpack.c.bf16 %v1235, %v1234
    %v1243 = vpack.c.bf16 %v1237, %v1236
    %v1244 = vpack.c.bf16 %v1239, %v1238
    %v1245 = vpack.c.bf16 %v1241, %v1240
    %1246 = vmatprep.subr.bf16.mxu0 0
    %1247 = vmatpush1.bf16.msra.mxu0 %v1242
    %1248 = vmatprep.subr.bf16.mxu0 0
    %1249 = vmatpush1.bf16.msra.mxu0 %v1243
    %1250 = vmatprep.subr.bf16.mxu0 0
    %1251 = vmatpush1.bf16.msra.mxu0 %v1244
    %1252 = vmatprep.subr.bf16.mxu0 0
    %1253 = vmatpush1.bf16.msra.mxu0 %v1245
    %1254 = vmatprep.subr.bf16.mxu0 0
    %1255 = vmatpush1.bf16.msra.mxu0 0
    %1256 = vmatprep.subr.bf16.mxu0 0
    %1257 = vmatpush1.bf16.msra.mxu0 0
    %1258 = vmatprep.subr.bf16.mxu0 0
    %1259 = vmatpush1.bf16.msra.mxu0 0
    %1260 = vmatprep.subr.bf16.mxu0 0
    %1261 = vmatpush1.bf16.msra.mxu0 0
    %1262 = vmatprep.subr.bf16.mxu0 0
    %1263 = vmatpush1.bf16.msra.mxu0 0
    %1264 = vmatprep.subr.bf16.mxu0 0
    %1265 = vmatpush1.bf16.msra.mxu0 0
    %1266 = vmatprep.subr.bf16.mxu0 0
    %1267 = vmatpush1.bf16.msra.mxu0 0
    %1268 = vmatprep.subr.bf16.mxu0 0
    %1269 = vmatpush1.bf16.msra.mxu0 0
    %1270 = vmatprep.subr.bf16.mxu0 0
    %1271 = vmatpush1.bf16.msra.mxu0 0
    %1272 = vmatprep.subr.bf16.mxu0 0
    %1273 = vmatpush1.bf16.msra.mxu0 0
    %1274 = vmatprep.subr.bf16.mxu0 0
    %1275 = vmatpush1.bf16.msra.mxu0 0
    %1276 = vmatprep.subr.bf16.mxu0 0
    %1277 = vmatpush1.bf16.msra.mxu0 0
    %1278 = vmatprep.mubr.bf16.mxu0 0
    %1279 = vmatmul.mubr.bf16.gmra.mrb[0].mxu0 %v863
    %v1280 = vpop.f32.mrb[0].mxu0
    %v1281 = vadd.f32 0.0, %v1280
    %v1282 = vpop.f32.mrb[0].mxu0
    %v1283 = vpop.f32.mrb[0].mxu0
    %v1284 = vadd.f32 0.0, %v1283
    %v1285 = vpop.f32.mrb[0].mxu0
    %1286 = vmatprep.mubr.bf16.mxu0 0
    %1287 = vmatmul.mubr.bf16.gmra.mrb[0].mxu0 %v866
    %v1288 = vpop.f32.mrb[0].mxu0
    %v1289 = vadd.f32 0.0, %v1288
    %v1290 = vpop.f32.mrb[0].mxu0
    %v1291 = vpop.f32.mrb[0].mxu0
    %v1292 = vadd.f32 0.0, %v1291
    %v1293 = vpop.f32.mrb[0].mxu0
    %1294 = vmatprep.mubr.bf16.mxu0 0
    %1295 = vmatmul.mubr.bf16.gmra.mrb[0].mxu0 %v869
    %v1296 = vpop.f32.mrb[0].mxu0
    %v1297 = vadd.f32 0.0, %v1296
    %v1298 = vpop.f32.mrb[0].mxu0
    %v1299 = vpop.f32.mrb[0].mxu0
    %v1300 = vadd.f32 0.0, %v1299
    %v1301 = vpop.f32.mrb[0].mxu0
    %1302 = vmatprep.mubr.bf16.mxu0 0
    %1303 = vmatmul.mubr.bf16.gmra.mrb[0].mxu0 %v872
    %v1304 = vpop.f32.mrb[0].mxu0
    %v1305 = vadd.f32 0.0, %v1304
    %v1306 = vpop.f32.mrb[0].mxu0
    %v1307 = vpop.f32.mrb[0].mxu0
    %v1308 = vadd.f32 0.0, %v1307
    %v1309 = vpop.f32.mrb[0].mxu0
    %1310 = vdwg.mxu0
    %v1311 = vmul.f32 %v603, %v1281
    %v1312 = vmul.f32 %v604, %v1284
    %v1313 = vmul.f32 %v605, %v1289
    %v1314 = vmul.f32 %v606, %v1292
    %v1315 = vmul.f32 %v607, %v1297
    %v1316 = vmul.f32 %v608, %v1300
    %v1317 = vmul.f32 %v609, %v1305
    %v1318 = vmul.f32 %v610, %v1308
    %v1319 = vadd.f32 %v1311, %v595
    %v1320 = vadd.f32 %v1312, %v596
    %v1321 = vadd.f32 %v1313, %v597
    %v1322 = vadd.f32 %v1314, %v598
    %v1323 = vadd.f32 %v1315, %v599
    %v1324 = vadd.f32 %v1316, %v600
    %v1325 = vadd.f32 %v1317, %v601
    %v1326 = vadd.f32 %v1318, %v602
    %v1327 = vmul.f32 %v558, %v1319
    %v1328 = vmul.f32 %v563, %v1320
    %v1329 = vmul.f32 %v568, %v1321
    %v1330 = vmul.f32 %v573, %v1322
    %v1331 = vmul.f32 %v578, %v1323
    %v1332 = vmul.f32 %v583, %v1324
    %v1333 = vmul.f32 %v588, %v1325
    %v1334 = vmul.f32 %v593, %v1326
    %v1335 = vpack.c.bf16 %v1328, %v1327
    %v1336 = vpack.c.bf16 %v1330, %v1329
    %v1337 = vpack.c.bf16 %v1332, %v1331
    %v1338 = vpack.c.bf16 %v1334, %v1333
    %1339 = vmatprep.subr.bf16.mxu0 0
    %1340 = vmatpush1.bf16.msra.mxu0 %v1335
    %1341 = vmatprep.subr.bf16.mxu0 0
    %1342 = vmatpush1.bf16.msra.mxu0 %v1336
    %1343 = vmatprep.subr.bf16.mxu0 0
    %1344 = vmatpush1.bf16.msra.mxu0 %v1337
    %1345 = vmatprep.subr.bf16.mxu0 0
    %1346 = vmatpush1.bf16.msra.mxu0 %v1338
    %1347 = vmatprep.subr.bf16.mxu0 0
    %1348 = vmatpush1.bf16.msra.mxu0 0
    %1349 = vmatprep.subr.bf16.mxu0 0
    %1350 = vmatpush1.bf16.msra.mxu0 0
    %1351 = vmatprep.subr.bf16.mxu0 0
    %1352 = vmatpush1.bf16.msra.mxu0 0
    %1353 = vmatprep.subr.bf16.mxu0 0
    %1354 = vmatpush1.bf16.msra.mxu0 0
    %1355 = vmatprep.subr.bf16.mxu0 0
    %1356 = vmatpush1.bf16.msra.mxu0 0
    %1357 = vmatprep.subr.bf16.mxu0 0
    %1358 = vmatpush1.bf16.msra.mxu0 0
    %1359 = vmatprep.subr.bf16.mxu0 0
    %1360 = vmatpush1.bf16.msra.mxu0 0
    %1361 = vmatprep.subr.bf16.mxu0 0
    %1362 = vmatpush1.bf16.msra.mxu0 0
    %1363 = vmatprep.subr.bf16.mxu0 0
    %1364 = vmatpush1.bf16.msra.mxu0 0
    %1365 = vmatprep.subr.bf16.mxu0 0
    %1366 = vmatpush1.bf16.msra.mxu0 0
    %1367 = vmatprep.subr.bf16.mxu0 0
    %1368 = vmatpush1.bf16.msra.mxu0 0
    %1369 = vmatprep.subr.bf16.mxu0 0
    %1370 = vmatpush1.bf16.msra.mxu0 0
    %1371 = vmatprep.mubr.bf16.mxu0 0
    %1372 = vmatmul.mubr.bf16.gmra.mrb[0].mxu0 %v863
    %v1373 = vpop.f32.mrb[0].mxu0
    %v1374 = vadd.f32 0.0, %v1373
    %v1375 = vpop.f32.mrb[0].mxu0
    %v1376 = vpop.f32.mrb[0].mxu0
    %v1377 = vadd.f32 0.0, %v1376
    %v1378 = vpop.f32.mrb[0].mxu0
    %1379 = vmatprep.mubr.bf16.mxu0 0
    %1380 = vmatmul.mubr.bf16.gmra.mrb[0].mxu0 %v866
    %v1381 = vpop.f32.mrb[0].mxu0
    %v1382 = vadd.f32 0.0, %v1381
    %v1383 = vpop.f32.mrb[0].mxu0
    %v1384 = vpop.f32.mrb[0].mxu0
    %v1385 = vadd.f32 0.0, %v1384
    %v1386 = vpop.f32.mrb[0].mxu0
    %1387 = vmatprep.mubr.bf16.mxu0 0
    %1388 = vmatmul.mubr.bf16.gmra.mrb[0].mxu0 %v869
    %v1389 = vpop.f32.mrb[0].mxu0
    %v1390 = vadd.f32 0.0, %v1389
    %v1391 = vpop.f32.mrb[0].mxu0
    %v1392 = vpop.f32.mrb[0].mxu0
    %v1393 = vadd.f32 0.0, %v1392
    %v1394 = vpop.f32.mrb[0].mxu0
    %1395 = vmatprep.mubr.bf16.mxu0 0
    %1396 = vmatmul.mubr.bf16.gmra.mrb[0].mxu0 %v872
    %v1397 = vpop.f32.mrb[0].mxu0
    %v1398 = vadd.f32 0.0, %v1397
    %v1399 = vpop.f32.mrb[0].mxu0
    %v1400 = vpop.f32.mrb[0].mxu0
    %v1401 = vadd.f32 0.0, %v1400
    %v1402 = vpop.f32.mrb[0].mxu0
    %1403 = vdwg.mxu0
    %v1404 = vmul.f32 %v603, %v1374
    %v1405 = vmul.f32 %v604, %v1377
    %v1406 = vmul.f32 %v605, %v1382
    %v1407 = vmul.f32 %v606, %v1385
    %v1408 = vmul.f32 %v607, %v1390
    %v1409 = vmul.f32 %v608, %v1393
    %v1410 = vmul.f32 %v609, %v1398
    %v1411 = vmul.f32 %v610, %v1401
    %v1412 = vadd.f32 %v1404, %v595
    %v1413 = vadd.f32 %v1405, %v596
    %v1414 = vadd.f32 %v1406, %v597
    %v1415 = vadd.f32 %v1407, %v598
    %v1416 = vadd.f32 %v1408, %v599
    %v1417 = vadd.f32 %v1409, %v600
    %v1418 = vadd.f32 %v1410, %v601
    %v1419 = vadd.f32 %v1411, %v602
    %v1420 = vmul.f32 %v558, %v1412
    %v1421 = vmul.f32 %v563, %v1413
    %v1422 = vmul.f32 %v568, %v1414
    %v1423 = vmul.f32 %v573, %v1415
    %v1424 = vmul.f32 %v578, %v1416
    %v1425 = vmul.f32 %v583, %v1417
    %v1426 = vmul.f32 %v588, %v1418
    %v1427 = vmul.f32 %v593, %v1419
    %v1428 = vpack.c.bf16 %v1421, %v1420
    %v1429 = vpack.c.bf16 %v1423, %v1422
    %v1430 = vpack.c.bf16 %v1425, %v1424
    %v1431 = vpack.c.bf16 %v1427, %v1426
    %1432 = vmatprep.subr.bf16.mxu0 0
    %1433 = vmatpush1.bf16.msra.mxu0 %v1428
    %1434 = vmatprep.subr.bf16.mxu0 0
    %1435 = vmatpush1.bf16.msra.mxu0 %v1429
    %1436 = vmatprep.subr.bf16.mxu0 0
    %1437 = vmatpush1.bf16.msra.mxu0 %v1430
    %1438 = vmatprep.subr.bf16.mxu0 0
    %1439 = vmatpush1.bf16.msra.mxu0 %v1431
    %1440 = vmatprep.subr.bf16.mxu0 0
    %1441 = vmatpush1.bf16.msra.mxu0 0
    %1442 = vmatprep.subr.bf16.mxu0 0
    %1443 = vmatpush1.bf16.msra.mxu0 0
    %1444 = vmatprep.subr.bf16.mxu0 0
    %1445 = vmatpush1.bf16.msra.mxu0 0
    %1446 = vmatprep.subr.bf16.mxu0 0
    %1447 = vmatpush1.bf16.msra.mxu0 0
    %1448 = vmatprep.subr.bf16.mxu0 0
    %1449 = vmatpush1.bf16.msra.mxu0 0
    %1450 = vmatprep.subr.bf16.mxu0 0
    %1451 = vmatpush1.bf16.msra.mxu0 0
    %1452 = vmatprep.subr.bf16.mxu0 0
    %1453 = vmatpush1.bf16.msra.mxu0 0
    %1454 = vmatprep.subr.bf16.mxu0 0
    %1455 = vmatpush1.bf16.msra.mxu0 0
    %1456 = vmatprep.subr.bf16.mxu0 0
    %1457 = vmatpush1.bf16.msra.mxu0 0
    %1458 = vmatprep.subr.bf16.mxu0 0
    %1459 = vmatpush1.bf16.msra.mxu0 0
    %1460 = vmatprep.subr.bf16.mxu0 0
    %1461 = vmatpush1.bf16.msra.mxu0 0
    %1462 = vmatprep.subr.bf16.mxu0 0
    %1463 = vmatpush1.bf16.msra.mxu0 0
    %1464 = vmatprep.mubr.bf16.mxu0 0
    %1465 = vmatmul.mubr.bf16.gmra.mrb[0].mxu0 %v863
    %v1466 = vpop.f32.mrb[0].mxu0
    %v1467 = vadd.f32 0.0, %v1466
    %v1468 = vpop.f32.mrb[0].mxu0
    %v1469 = vpop.f32.mrb[0].mxu0
    %v1470 = vadd.f32 0.0, %v1469
    %v1471 = vpop.f32.mrb[0].mxu0
    %1472 = vmatprep.mubr.bf16.mxu0 0
    %1473 = vmatmul.mubr.bf16.gmra.mrb[0].mxu0 %v866
    %v1474 = vpop.f32.mrb[0].mxu0
    %v1475 = vadd.f32 0.0, %v1474
    %v1476 = vpop.f32.mrb[0].mxu0
    %v1477 = vpop.f32.mrb[0].mxu0
    %v1478 = vadd.f32 0.0, %v1477
    %v1479 = vpop.f32.mrb[0].mxu0
    %1480 = vmatprep.mubr.bf16.mxu0 0
    %1481 = vmatmul.mubr.bf16.gmra.mrb[0].mxu0 %v869
    %v1482 = vpop.f32.mrb[0].mxu0
    %v1483 = vadd.f32 0.0, %v1482
    %v1484 = vpop.f32.mrb[0].mxu0
    %v1485 = vpop.f32.mrb[0].mxu0
    %v1486 = vadd.f32 0.0, %v1485
    %v1487 = vpop.f32.mrb[0].mxu0
    %1488 = vmatprep.mubr.bf16.mxu0 0
    %1489 = vmatmul.mubr.bf16.gmra.mrb[0].mxu0 %v872
    %v1490 = vpop.f32.mrb[0].mxu0
    %v1491 = vadd.f32 0.0, %v1490
    %v1492 = vpop.f32.mrb[0].mxu0
    %v1493 = vpop.f32.mrb[0].mxu0
    %v1494 = vadd.f32 0.0, %v1493
    %v1495 = vpop.f32.mrb[0].mxu0
    %1496 = vdwg.mxu0
    %v1497 = vmul.f32 %v603, %v1467
    %v1498 = vmul.f32 %v604, %v1470
    %v1499 = vmul.f32 %v605, %v1475
    %v1500 = vmul.f32 %v606, %v1478
    %v1501 = vmul.f32 %v607, %v1483
    %v1502 = vmul.f32 %v608, %v1486
    %v1503 = vmul.f32 %v609, %v1491
    %v1504 = vmul.f32 %v610, %v1494
    %v1505 = vadd.f32 %v1497, %v595
    %v1506 = vadd.f32 %v1498, %v596
    %v1507 = vadd.f32 %v1499, %v597
    %v1508 = vadd.f32 %v1500, %v598
    %v1509 = vadd.f32 %v1501, %v599
    %v1510 = vadd.f32 %v1502, %v600
    %v1511 = vadd.f32 %v1503, %v601
    %v1512 = vadd.f32 %v1504, %v602
    %v1513 = vmul.f32 %v558, %v1505
    %v1514 = vmul.f32 %v563, %v1506
    %v1515 = vmul.f32 %v568, %v1507
    %v1516 = vmul.f32 %v573, %v1508
    %v1517 = vmul.f32 %v578, %v1509
    %v1518 = vmul.f32 %v583, %v1510
    %v1519 = vmul.f32 %v588, %v1511
    %v1520 = vmul.f32 %v593, %v1512
    %v1521 = vpack.c.bf16 %v1514, %v1513
    %v1522 = vpack.c.bf16 %v1516, %v1515
    %v1523 = vpack.c.bf16 %v1518, %v1517
    %v1524 = vpack.c.bf16 %v1520, %v1519
    %1525 = vmatprep.subr.bf16.mxu0 0
    %1526 = vmatpush1.bf16.msra.mxu0 %v1521
    %1527 = vmatprep.subr.bf16.mxu0 0
    %1528 = vmatpush1.bf16.msra.mxu0 %v1522
    %1529 = vmatprep.subr.bf16.mxu0 0
    %1530 = vmatpush1.bf16.msra.mxu0 %v1523
    %1531 = vmatprep.subr.bf16.mxu0 0
    %1532 = vmatpush1.bf16.msra.mxu0 %v1524
    %1533 = vmatprep.subr.bf16.mxu0 0
    %1534 = vmatpush1.bf16.msra.mxu0 0
    %1535 = vmatprep.subr.bf16.mxu0 0
    %1536 = vmatpush1.bf16.msra.mxu0 0
    %1537 = vmatprep.subr.bf16.mxu0 0
    %1538 = vmatpush1.bf16.msra.mxu0 0
    %1539 = vmatprep.subr.bf16.mxu0 0
    %1540 = vmatpush1.bf16.msra.mxu0 0
    %1541 = vmatprep.subr.bf16.mxu0 0
    %1542 = vmatpush1.bf16.msra.mxu0 0
    %1543 = vmatprep.subr.bf16.mxu0 0
    %1544 = vmatpush1.bf16.msra.mxu0 0
    %1545 = vmatprep.subr.bf16.mxu0 0
    %1546 = vmatpush1.bf16.msra.mxu0 0
    %1547 = vmatprep.subr.bf16.mxu0 0
    %1548 = vmatpush1.bf16.msra.mxu0 0
    %1549 = vmatprep.subr.bf16.mxu0 0
    %1550 = vmatpush1.bf16.msra.mxu0 0
    %1551 = vmatprep.subr.bf16.mxu0 0
    %1552 = vmatpush1.bf16.msra.mxu0 0
    %1553 = vmatprep.subr.bf16.mxu0 0
    %1554 = vmatpush1.bf16.msra.mxu0 0
    %1555 = vmatprep.subr.bf16.mxu0 0
    %1556 = vmatpush1.bf16.msra.mxu0 0
    %1557 = vmatprep.mubr.bf16.mxu0 0
    %1558 = vmatmul.mubr.bf16.gmra.mrb[0].mxu0 %v863
    %v1559 = vpop.f32.mrb[0].mxu0
    %v1560 = vadd.f32 0.0, %v1559
    %v1561 = vpop.f32.mrb[0].mxu0
    %v1562 = vpop.f32.mrb[0].mxu0
    %v1563 = vadd.f32 0.0, %v1562
    %v1564 = vpop.f32.mrb[0].mxu0
    %1565 = vmatprep.mubr.bf16.mxu0 0
    %1566 = vmatmul.mubr.bf16.gmra.mrb[0].mxu0 %v866
    %v1567 = vpop.f32.mrb[0].mxu0
    %v1568 = vadd.f32 0.0, %v1567
    %v1569 = vpop.f32.mrb[0].mxu0
    %v1570 = vpop.f32.mrb[0].mxu0
    %v1571 = vadd.f32 0.0, %v1570
    %v1572 = vpop.f32.mrb[0].mxu0
    %1573 = vmatprep.mubr.bf16.mxu0 0
    %1574 = vmatmul.mubr.bf16.gmra.mrb[0].mxu0 %v869
    %v1575 = vpop.f32.mrb[0].mxu0
    %v1576 = vadd.f32 0.0, %v1575
    %v1577 = vpop.f32.mrb[0].mxu0
    %v1578 = vpop.f32.mrb[0].mxu0
    %v1579 = vadd.f32 0.0, %v1578
    %v1580 = vpop.f32.mrb[0].mxu0
    %1581 = vmatprep.mubr.bf16.mxu0 0
    %1582 = vmatmul.mubr.bf16.gmra.mrb[0].mxu0 %v872
    %v1583 = vpop.f32.mrb[0].mxu0
    %v1584 = vadd.f32 0.0, %v1583
    %v1585 = vpop.f32.mrb[0].mxu0
    %v1586 = vpop.f32.mrb[0].mxu0
    %v1587 = vadd.f32 0.0, %v1586
    %v1588 = vpop.f32.mrb[0].mxu0
    %1589 = vdwg.mxu0
    %v1590 = vmul.f32 %v603, %v1560
    %v1591 = vmul.f32 %v604, %v1563
    %v1592 = vmul.f32 %v605, %v1568
    %v1593 = vmul.f32 %v606, %v1571
    %v1594 = vmul.f32 %v607, %v1576
    %v1595 = vmul.f32 %v608, %v1579
    %v1596 = vmul.f32 %v609, %v1584
    %v1597 = vmul.f32 %v610, %v1587
    %v1598 = vadd.f32 %v1590, %v595
    %v1599 = vadd.f32 %v1591, %v596
    %v1600 = vadd.f32 %v1592, %v597
    %v1601 = vadd.f32 %v1593, %v598
    %v1602 = vadd.f32 %v1594, %v599
    %v1603 = vadd.f32 %v1595, %v600
    %v1604 = vadd.f32 %v1596, %v601
    %v1605 = vadd.f32 %v1597, %v602
    %v1606 = vmul.f32 %v558, %v1598
    %v1607 = vmul.f32 %v563, %v1599
    %v1608 = vmul.f32 %v568, %v1600
    %v1609 = vmul.f32 %v573, %v1601
    %v1610 = vmul.f32 %v578, %v1602
    %v1611 = vmul.f32 %v583, %v1603
    %v1612 = vmul.f32 %v588, %v1604
    %v1613 = vmul.f32 %v593, %v1605
    %v1614 = vpack.c.bf16 %v1607, %v1606
    %v1615 = vpack.c.bf16 %v1609, %v1608
    %v1616 = vpack.c.bf16 %v1611, %v1610
    %v1617 = vpack.c.bf16 %v1613, %v1612
    %1618 = vmatprep.subr.bf16.mxu0 0
    %1619 = vmatpush1.bf16.msra.mxu0 %v1614
    %1620 = vmatprep.subr.bf16.mxu0 0
    %1621 = vmatpush1.bf16.msra.mxu0 %v1615
    %1622 = vmatprep.subr.bf16.mxu0 0
    %1623 = vmatpush1.bf16.msra.mxu0 %v1616
    %1624 = vmatprep.subr.bf16.mxu0 0
    %1625 = vmatpush1.bf16.msra.mxu0 %v1617
    %1626 = vmatprep.subr.bf16.mxu0 0
    %1627 = vmatpush1.bf16.msra.mxu0 0
    %1628 = vmatprep.subr.bf16.mxu0 0
    %1629 = vmatpush1.bf16.msra.mxu0 0
    %1630 = vmatprep.subr.bf16.mxu0 0
    %1631 = vmatpush1.bf16.msra.mxu0 0
    %1632 = vmatprep.subr.bf16.mxu0 0
    %1633 = vmatpush1.bf16.msra.mxu0 0
    %1634 = vmatprep.subr.bf16.mxu0 0
    %1635 = vmatpush1.bf16.msra.mxu0 0
    %1636 = vmatprep.subr.bf16.mxu0 0
    %1637 = vmatpush1.bf16.msra.mxu0 0
    %1638 = vmatprep.subr.bf16.mxu0 0
    %1639 = vmatpush1.bf16.msra.mxu0 0
    %1640 = vmatprep.subr.bf16.mxu0 0
    %1641 = vmatpush1.bf16.msra.mxu0 0
    %1642 = vmatprep.subr.bf16.mxu0 0
    %1643 = vmatpush1.bf16.msra.mxu0 0
    %1644 = vmatprep.subr.bf16.mxu0 0
    %1645 = vmatpush1.bf16.msra.mxu0 0
    %1646 = vmatprep.subr.bf16.mxu0 0
    %1647 = vmatpush1.bf16.msra.mxu0 0
    %1648 = vmatprep.subr.bf16.mxu0 0
    %1649 = vmatpush1.bf16.msra.mxu0 0
    %1650 = vmatprep.mubr.bf16.mxu0 0
    %1651 = vmatmul.mubr.bf16.gmra.mrb[0].mxu0 %v863
    %v1652 = vpop.f32.mrb[0].mxu0
    %v1653 = vadd.f32 0.0, %v1652
    %v1654 = vpop.f32.mrb[0].mxu0
    %v1655 = vpop.f32.mrb[0].mxu0
    %v1656 = vadd.f32 0.0, %v1655
    %v1657 = vpop.f32.mrb[0].mxu0
    %1658 = vmatprep.mubr.bf16.mxu0 0
    %1659 = vmatmul.mubr.bf16.gmra.mrb[0].mxu0 %v866
    %v1660 = vpop.f32.mrb[0].mxu0
    %v1661 = vadd.f32 0.0, %v1660
    %v1662 = vpop.f32.mrb[0].mxu0
    %v1663 = vpop.f32.mrb[0].mxu0
    %v1664 = vadd.f32 0.0, %v1663
    %v1665 = vpop.f32.mrb[0].mxu0
    %1666 = vmatprep.mubr.bf16.mxu0 0
    %1667 = vmatmul.mubr.bf16.gmra.mrb[0].mxu0 %v869
    %v1668 = vpop.f32.mrb[0].mxu0
    %v1669 = vadd.f32 0.0, %v1668
    %v1670 = vpop.f32.mrb[0].mxu0
    %v1671 = vpop.f32.mrb[0].mxu0
    %v1672 = vadd.f32 0.0, %v1671
    %v1673 = vpop.f32.mrb[0].mxu0
    %1674 = vmatprep.mubr.bf16.mxu0 0
    %1675 = vmatmul.mubr.bf16.gmra.mrb[0].mxu0 %v872
    %v1676 = vpop.f32.mrb[0].mxu0
    %v1677 = vadd.f32 0.0, %v1676
    %v1678 = vpop.f32.mrb[0].mxu0
    %v1679 = vpop.f32.mrb[0].mxu0
    %v1680 = vadd.f32 0.0, %v1679
    %v1681 = vpop.f32.mrb[0].mxu0
    %1682 = vdwg.mxu0
    %v1683 = vmul.f32 %v603, %v1653
    %v1684 = vmul.f32 %v604, %v1656
    %v1685 = vmul.f32 %v605, %v1661
    %v1686 = vmul.f32 %v606, %v1664
    %v1687 = vmul.f32 %v607, %v1669
    %v1688 = vmul.f32 %v608, %v1672
    %v1689 = vmul.f32 %v609, %v1677
    %v1690 = vmul.f32 %v610, %v1680
    %v1691 = vadd.f32 %v1683, %v595
    %v1692 = vadd.f32 %v1684, %v596
    %v1693 = vadd.f32 %v1685, %v597
    %v1694 = vadd.f32 %v1686, %v598
    %v1695 = vadd.f32 %v1687, %v599
    %v1696 = vadd.f32 %v1688, %v600
    %v1697 = vadd.f32 %v1689, %v601
    %v1698 = vadd.f32 %v1690, %v602
    %1699 = vst [vmem:[#allocation5] sm:$0xff] %v1691
    %1700 = vst [vmem:[#allocation5 + $0x8] sm:$0xff] %v1692
    %1701 = vst [vmem:[#allocation5 + $0x10] sm:$0xff] %v1693
    %1702 = vst [vmem:[#allocation5 + $0x18] sm:$0xff] %v1694
    %1703 = vst [vmem:[#allocation5 + $0x20] sm:$0xff] %v1695
    %1704 = vst [vmem:[#allocation5 + $0x28] sm:$0xff] %v1696
    %1705 = vst [vmem:[#allocation5 + $0x30] sm:$0xff] %v1697
    %1706 = vst [vmem:[#allocation5 + $0x38] sm:$0xff] %v1698
    // Predicated region
    $region170: #{tpu_custom_call.1} parent=1 // pred_check
      _
    $region171: #{tpu_custom_call.1} parent=1 // pred_check_branch
      %1708 = sbr.rel (0) target = $region173
    $region172: #{tpu_custom_call.1} parent=1 // pred_region
      %s1710 = ssub.s32 1024, 1024
      %1711 = vsyncadd [#allocation6], %s1710
      %s1712 = sshll.u32 [#allocation5], 4
      %s1713 = int_to_ptr.vmem [resolvable:$true] %s1712
      %1718 = dma.vmem_to_hbm [thread:$0]  %s1713, 1024, %s9, [#allocation6], 128, 128, 8
    $region173: #{tpu_custom_call.1} parent=1 // pred_fallthru
      _
    // Predicated region
    $region174: #{tpu_custom_call.1} parent=1 // pred_check
      _
    $region175: #{tpu_custom_call.1} parent=1 // pred_check_branch
      %1720 = sbr.rel (0) target = $region177
    $region176: #{tpu_custom_call.1} parent=1 // pred_region
      %1721 = dma.done [#allocation6], 1024
    $region177: #{tpu_custom_call.1} parent=1 // pred_fallthru
      _
    %1722 = vsyncpa [#allocation6], 1
  %1723 = vsyncmov [#allocation4]
  %s1724 = vpop.sfrf %1723
  %p1725 = scmp.eq.s32.totalorder %s1724, 0
  %p1726 = pneg %p1725
  %1728 = shalt.err (%p1726)
  %s1729 = scalar_lea.sflag [#allocation4], 1
  %1730 = vsyncmov %s1729
  %s1731 = vpop.sfrf %1730
  %p1732 = scmp.eq.s32.totalorder %s1731, 0
  %p1733 = pneg %p1732
  %1735 = shalt.err (%p1733)
  %s1736 = scalar_lea.sflag [#allocation4], 2
  %1737 = vsyncmov %s1736
  %s1738 = vpop.sfrf %1737
  %p1739 = scmp.eq.s32.totalorder %s1738, 0
  %p1740 = pneg %p1739
  %1742 = shalt.err (%p1740)
  %s1743 = scalar_lea.sflag [#allocation4], 3
  %1744 = vsyncmov %s1743
  %s1745 = vpop.sfrf %1744
  %p1746 = scmp.eq.s32.totalorder %s1745, 0
  %p1747 = pneg %p1746
  %1749 = shalt.err (%p1747)

</llo_original>
